<compile_context>
chip_gen: v6e
topology: v6e:2x2x1
jax: 0.10.0
libtpu: 0.0.40
codegen_flags: <defaults>
</compile_context>

<pallas_src>
import jax
import jax.numpy as jnp
from jax.experimental import pallas as pl
from jax.experimental.pallas import tpu as pltpu


def _frelu_kernel(x_ref, top_ref, bot_ref, w_ref, shift_ref, o_ref, xp_ref):
    # x_ref:     (1, TH, W, TC)    main activation tile (also used for the max)
    # top_ref:   (1, 1,  W, TC)    row just above the tile (clamped; zeroed at h==0)
    # bot_ref:   (1, 1,  W, TC)    row just below the tile (clamped; zeroed at last h)
    # w_ref:     (3, 3, TC)        depthwise 3x3 weights with BN scale pre-folded
    # shift_ref: (1, TC)           BN shift = beta - mean * scale
    # o_ref:     (1, TH, W, TC)
    # xp_ref:    (1, TH+2, W+2, TC) f32 VMEM scratch: zero-padded working tile
    h_idx = pl.program_id(1)
    TH = x_ref.shape[1]
    W = x_ref.shape[2]

    x = x_ref[...].astype(jnp.float32)

    # Assemble the zero-padded tile in VMEM (padding fused into the kernel:
    # no extra HBM round-trip for a padded copy of the activations).
    xp_ref[...] = jnp.zeros_like(xp_ref)
    xp_ref[:, 1:TH + 1, 1:W + 1, :] = x

    @pl.when(h_idx > 0)
    def _():  # real neighbour row above (interior tile boundary)
        xp_ref[:, 0:1, 1:W + 1, :] = top_ref[...].astype(jnp.float32)

    @pl.when(h_idx < pl.num_programs(1) - 1)
    def _():  # real neighbour row below (interior tile boundary)
        xp_ref[:, TH + 1:TH + 2, 1:W + 1, :] = bot_ref[...].astype(jnp.float32)

    xp = xp_ref[...]
    acc = jnp.zeros_like(x)
    # Depthwise 3x3 conv as shifted multiply-adds.  Only the kw shift touches
    # the sublane (W) axis, so hoist it: 3 unaligned W-slices total, the kh
    # slices are along a leading, untiled dim (cheap).
    for kw in range(3):
        xw = xp[:, :, kw:kw + W, :]                   # (1, TH+2, W, TC)
        for kh in range(3):
            wkk = w_ref[kh, kw, :].astype(jnp.float32)  # (TC,) scale already folded
            acc = acc + xw[:, kh:kh + TH, :, :] * wkk

    bn = acc + shift_ref[0, :].astype(jnp.float32)
    o_ref[...] = jnp.maximum(x, bn).astype(o_ref.dtype)


def frelu_nhwc(x_nhwc, w_dw, gamma, beta, running_mean, running_var, eps=1e-5,
               th_max=64):
    """FReLU forward on an NHWC activation (no layout glue, no HBM pad copy).

    x_nhwc: (N, H, W, C); w_dw: (C, 3, 3) depthwise weight;
    gamma/beta/running_mean/running_var: (C,) BatchNorm inference params.
    """
    N, H, W, C = x_nhwc.shape

    # Fold BN (inference) into the conv weights / a per-channel shift.
    scale = (gamma / jnp.sqrt(running_var + eps)).astype(jnp.float32)
    w_folded = (jnp.transpose(w_dw, (1, 2, 0)).astype(jnp.float32)
                * scale[None, None, :])                      # (3, 3, C)
    shift = (beta.astype(jnp.float32)
             - running_mean.astype(jnp.float32) * scale).reshape(1, C)

    # Tile sizes: channel tile is lane-dense when C is a multiple of 128,
    # otherwise the full (small) C; row tile is the largest divisor of H
    # <= th_max so halo logic stays exact and blocks fit v7x's 64 MiB VMEM.
    TC = 128 if (C % 128 == 0) else C
    TH = max(d for d in range(1, min(H, th_max) + 1) if H % d == 0)
    num_h = H // TH
    num_c = C // TC

    out_nhwc = pl.pallas_call(
        _frelu_kernel,
        out_shape=jax.ShapeDtypeStruct((N, H, W, C), x_nhwc.dtype),
        grid_spec=pltpu.PrefetchScalarGridSpec(
            num_scalar_prefetch=0,
            grid=(N, num_h, num_c),
            in_specs=[
                # main tile
                pl.BlockSpec((1, TH, W, TC), lambda n, h, c: (n, h, 0, c)),
                # 1-row halo above (clamped at the top edge, masked in-kernel)
                pl.BlockSpec((1, 1, W, TC),
                             lambda n, h, c: (n, jnp.maximum(h * TH - 1, 0), 0, c)),
                # 1-row halo below (clamped at the bottom edge, masked in-kernel)
                pl.BlockSpec((1, 1, W, TC),
                             lambda n, h, c: (n, jnp.minimum(h * TH + TH, H - 1), 0, c)),
                # BN-folded depthwise weights and BN shift (replicated over grid)
                pl.BlockSpec((3, 3, TC), lambda n, h, c: (0, 0, c)),
                pl.BlockSpec((1, TC), lambda n, h, c: (0, c)),
            ],
            out_specs=pl.BlockSpec((1, TH, W, TC), lambda n, h, c: (n, h, 0, c)),
            scratch_shapes=[pltpu.VMEM((1, TH + 2, W + 2, TC), jnp.float32)],
        ),
        compiler_params=pltpu.CompilerParams(
            # No cross-step accumulation: every grid axis is independent.
            dimension_semantics=("parallel", "parallel", "parallel")),
    )(x_nhwc, x_nhwc, x_nhwc, w_folded, shift)
    return out_nhwc


def frelu(x_nchw, w_dw, gamma, beta, running_mean, running_var, eps=1e-5):
    """NCHW adapter matching the PyTorch module layout.

    Prefer frelu_nhwc in an NHWC pipeline to avoid the two transposes below.
    """
    x = jnp.transpose(x_nchw, (0, 2, 3, 1))                     # NHWC
    out = frelu_nhwc(x, w_dw, gamma, beta, running_mean, running_var, eps)
    return jnp.transpose(out, (0, 3, 1, 2))                     # back to NCHW


def _reference(x_nchw, w_dw, gamma, beta, mean, var, eps=1e-5):
    """Pure-JAX reference (depthwise conv + inference BN + max)."""
    N, C, H, W = x_nchw.shape
    xp = jnp.pad(x_nchw, ((0, 0), (0, 0), (1, 1), (1, 1))).astype(jnp.float32)
    acc = jnp.zeros((N, C, H, W), jnp.float32)
    for kh in range(3):
        for kw in range(3):
            acc = acc + xp[:, :, kh:kh + H, kw:kw + W] * w_dw[:, kh, kw][None, :, None, None]
    scale = gamma / jnp.sqrt(var + eps)
    bn = acc * scale[None, :, None, None] + (beta - mean * scale)[None, :, None, None]
    return jnp.maximum(x_nchw.astype(jnp.float32), bn).astype(x_nchw.dtype)


if __name__ == "__main__":
    # TODO(synk): BatchNorm is implemented in inference mode (running stats);
    # PyTorch training-mode batch statistics are not computed here.
    key = jax.random.PRNGKey(0)
    k_x, k_w, k_g, k_b, k_m, k_v = jax.random.split(key, 6)

    N, C, H, W = 2, 4, 16, 16
    x = jax.random.normal(k_x, (N, C, H, W), dtype=jnp.float32)
    w_dw = jax.random.normal(k_w, (C, 3, 3), dtype=jnp.float32) * 0.1
    gamma = 1.0 + 0.1 * jax.random.normal(k_g, (C,), dtype=jnp.float32)
    beta = 0.1 * jax.random.normal(k_b, (C,), dtype=jnp.float32)
    running_mean = 0.1 * jax.random.normal(k_m, (C,), dtype=jnp.float32)
    running_var = 1.0 + 0.1 * jax.random.uniform(k_v, (C,), dtype=jnp.float32)

    out = frelu(x, w_dw, gamma, beta, running_mean, running_var)
    out = jax.block_until_ready(out)

    ref = _reference(x, w_dw, gamma, beta, running_mean, running_var)
    assert out.shape == (N, C, H, W)
    assert jnp.allclose(out, ref, atol=1e-5, rtol=1e-5), "mismatch vs reference"

    print("KERNEL_OK")
</pallas_src>

<mosaic_0001>
module attributes {stable_mosaic.version = 11 : i64} {
  func.func @_frelu_kernel(%arg0: i32, %arg1: i32, %arg2: i32, %arg3: memref<1x16x16x4xf32, #tpu.memory_space<vmem>>, %arg4: memref<1x1x16x4xf32, #tpu.memory_space<vmem>>, %arg5: memref<1x1x16x4xf32, #tpu.memory_space<vmem>>, %arg6: memref<3x3x4xf32, #tpu.memory_space<vmem>>, %arg7: memref<1x4xf32, #tpu.memory_space<vmem>>, %arg8: memref<1x16x16x4xf32, #tpu.memory_space<vmem>>, %arg9: memref<1x18x18x4xf32, #tpu.memory_space<vmem>>) attributes {dimension_semantics = [#tpu.dimension_semantics<parallel>, #tpu.dimension_semantics<parallel>, #tpu.dimension_semantics<parallel>], iteration_bounds = array<i64: 2, 1, 1>, scalar_prefetch = 0 : i64, scratch_operands = 1 : i64, tpu.core_type = #tpu.core_type<tc>, window_params = [{transform_indices = @transform_0, window_bounds = array<i64: 1, 16, 16, 4>}, {transform_indices = @transform_1, window_bounds = array<i64: 1, 1, 16, 4>}, {transform_indices = @transform_2, window_bounds = array<i64: 1, 1, 16, 4>}, {transform_indices = @transform_3, window_bounds = array<i64: 3, 3, 4>}, {transform_indices = @transform_4, window_bounds = array<i64: 1, 4>}, {transform_indices = @transform_5, window_bounds = array<i64: 1, 16, 16, 4>}]} {
    %c0 = arith.constant 0 : index
    %c0_0 = arith.constant 0 : index
    %c0_1 = arith.constant 0 : index
    %c0_2 = arith.constant 0 : index
    %0 = vector.load %arg3[%c0, %c0_0, %c0_1, %c0_2] : memref<1x16x16x4xf32, #tpu.memory_space<vmem>>, vector<1x16x16x4xf32>
    %cst = arith.constant 0.000000e+00 : f32
    %1 = vector.broadcast %cst : f32 to vector<1x18x18x4xf32>
    %c0_3 = arith.constant 0 : index
    %c0_4 = arith.constant 0 : index
    %c0_5 = arith.constant 0 : index
    %c0_6 = arith.constant 0 : index
    %2 = vector.load %arg9[%c0_3, %c0_4, %c0_5, %c0_6] : memref<1x18x18x4xf32, #tpu.memory_space<vmem>>, vector<1x18x18x4xf32>
    tpu.vector_store %arg9[%c0_3, %c0_4, %c0_5, %c0_6], %1 {strides = array<i32>} : memref<1x18x18x4xf32, #tpu.memory_space<vmem>>, vector<1x18x18x4xf32>,
    %c0_7 = arith.constant 0 : index
    %c1 = arith.constant 1 : index
    %c1_8 = arith.constant 1 : index
    %c0_9 = arith.constant 0 : index
    %3 = vector.load %arg9[%c0_7, %c1, %c1_8, %c0_9] : memref<1x18x18x4xf32, #tpu.memory_space<vmem>>, vector<1x16x16x4xf32>
    tpu.vector_store %arg9[%c0_7, %c1, %c1_8, %c0_9], %0 {strides = array<i32>} : memref<1x18x18x4xf32, #tpu.memory_space<vmem>>, vector<1x16x16x4xf32>,
    %c0_i32 = arith.constant 0 : i32
    %4 = arith.cmpi sgt, %arg1, %c0_i32 : i32
    %5 = arith.extui %4 : i1 to i32
    %c0_i32_10 = arith.constant 0 : i32
    %6 = arith.cmpi ne, %5, %c0_i32_10 : i32
    scf.if %6 {
      %c0_50 = arith.constant 0 : index
      %c0_51 = arith.constant 0 : index
      %c0_52 = arith.constant 0 : index
      %c0_53 = arith.constant 0 : index
      %85 = vector.load %arg4[%c0_50, %c0_51, %c0_52, %c0_53] : memref<1x1x16x4xf32, #tpu.memory_space<vmem>>, vector<1x1x16x4xf32>
      %c0_54 = arith.constant 0 : index
      %c0_55 = arith.constant 0 : index
      %c1_56 = arith.constant 1 : index
      %c0_57 = arith.constant 0 : index
      %86 = vector.load %arg9[%c0_54, %c0_55, %c1_56, %c0_57] : memref<1x18x18x4xf32, #tpu.memory_space<vmem>>, vector<1x1x16x4xf32>
      tpu.vector_store %arg9[%c0_54, %c0_55, %c1_56, %c0_57], %85 {strides = array<i32>} : memref<1x18x18x4xf32, #tpu.memory_space<vmem>>, vector<1x1x16x4xf32>,
    } else {
    }
    %c0_i32_11 = arith.constant 0 : i32
    %7 = arith.cmpi slt, %arg1, %c0_i32_11 : i32
    %8 = arith.extui %7 : i1 to i32
    %c0_i32_12 = arith.constant 0 : i32
    %9 = arith.cmpi ne, %8, %c0_i32_12 : i32
    scf.if %9 {
      %c0_50 = arith.constant 0 : index
      %c0_51 = arith.constant 0 : index
      %c0_52 = arith.constant 0 : index
      %c0_53 = arith.constant 0 : index
      %85 = vector.load %arg5[%c0_50, %c0_51, %c0_52, %c0_53] : memref<1x1x16x4xf32, #tpu.memory_space<vmem>>, vector<1x1x16x4xf32>
      %c0_54 = arith.constant 0 : index
      %c17 = arith.constant 17 : index
      %c1_55 = arith.constant 1 : index
      %c0_56 = arith.constant 0 : index
      %86 = vector.load %arg9[%c0_54, %c17, %c1_55, %c0_56] : memref<1x18x18x4xf32, #tpu.memory_space<vmem>>, vector<1x1x16x4xf32>
      tpu.vector_store %arg9[%c0_54, %c17, %c1_55, %c0_56], %85 {strides = array<i32>} : memref<1x18x18x4xf32, #tpu.memory_space<vmem>>, vector<1x1x16x4xf32>,
    } else {
    }
    %c0_13 = arith.constant 0 : index
    %c0_14 = arith.constant 0 : index
    %c0_15 = arith.constant 0 : index
    %c0_16 = arith.constant 0 : index
    %10 = vector.load %arg9[%c0_13, %c0_14, %c0_15, %c0_16] : memref<1x18x18x4xf32, #tpu.memory_space<vmem>>, vector<1x18x18x4xf32>
    %cst_17 = arith.constant 0.000000e+00 : f32
    %11 = vector.broadcast %cst_17 : f32 to vector<1x16x16x4xf32>
    %12 = vector.extract_strided_slice %10 {offsets = [0, 0, 0, 0], sizes = [1, 18, 16, 4], strides = [1, 1, 1, 1]} : vector<1x18x18x4xf32> to vector<1x18x16x4xf32>
    %c0_18 = arith.constant 0 : index
    %c0_19 = arith.constant 0 : index
    %c0_20 = arith.constant 0 : index
    %13 = vector.load %arg6[%c0_18, %c0_19, %c0_20] : memref<3x3x4xf32, #tpu.memory_space<vmem>>, vector<1x1x4xf32>
    %14 = vector.shape_cast %13 : vector<1x1x4xf32> to vector<4xf32>
    %15 = vector.extract_strided_slice %12 {offsets = [0, 0, 0, 0], sizes = [1, 16, 16, 4], strides = [1, 1, 1, 1]} : vector<1x18x16x4xf32> to vector<1x16x16x4xf32>
    %16 = vector.shape_cast %14 : vector<4xf32> to vector<1x1x1x4xf32>
    %17 = vector.broadcast %16 : vector<1x1x1x4xf32> to vector<1x16x16x4xf32>
    %18 = arith.mulf %15, %17 : vector<1x16x16x4xf32>
    %19 = arith.addf %11, %18 : vector<1x16x16x4xf32>
    %c1_21 = arith.constant 1 : index
    %c0_22 = arith.constant 0 : index
    %c0_23 = arith.constant 0 : index
    %20 = vector.load %arg6[%c1_21, %c0_22, %c0_23] : memref<3x3x4xf32, #tpu.memory_space<vmem>>, vector<1x1x4xf32>
    %21 = vector.shape_cast %20 : vector<1x1x4xf32> to vector<4xf32>
    %22 = vector.extract_strided_slice %12 {offsets = [0, 1, 0, 0], sizes = [1, 16, 16, 4], strides = [1, 1, 1, 1]} : vector<1x18x16x4xf32> to vector<1x16x16x4xf32>
    %23 = vector.shape_cast %21 : vector<4xf32> to vector<1x1x1x4xf32>
    %24 = vector.broadcast %23 : vector<1x1x1x4xf32> to vector<1x16x16x4xf32>
    %25 = arith.mulf %22, %24 : vector<1x16x16x4xf32>
    %26 = arith.addf %19, %25 : vector<1x16x16x4xf32>
    %c2 = arith.constant 2 : index
    %c0_24 = arith.constant 0 : index
    %c0_25 = arith.constant 0 : index
    %27 = vector.load %arg6[%c2, %c0_24, %c0_25] : memref<3x3x4xf32, #tpu.memory_space<vmem>>, vector<1x1x4xf32>
    %28 = vector.shape_cast %27 : vector<1x1x4xf32> to vector<4xf32>
    %29 = vector.extract_strided_slice %12 {offsets = [0, 2, 0, 0], sizes = [1, 16, 16, 4], strides = [1, 1, 1, 1]} : vector<1x18x16x4xf32> to vector<1x16x16x4xf32>
    %30 = vector.shape_cast %28 : vector<4xf32> to vector<1x1x1x4xf32>
    %31 = vector.broadcast %30 : vector<1x1x1x4xf32> to vector<1x16x16x4xf32>
    %32 = arith.mulf %29, %31 : vector<1x16x16x4xf32>
    %33 = arith.addf %26, %32 : vector<1x16x16x4xf32>
    %34 = vector.extract_strided_slice %10 {offsets = [0, 0, 1, 0], sizes = [1, 18, 16, 4], strides = [1, 1, 1, 1]} : vector<1x18x18x4xf32> to vector<1x18x16x4xf32>
    %c0_26 = arith.constant 0 : index
    %c1_27 = arith.constant 1 : index
    %c0_28 = arith.constant 0 : index
    %35 = vector.load %arg6[%c0_26, %c1_27, %c0_28] : memref<3x3x4xf32, #tpu.memory_space<vmem>>, vector<1x1x4xf32>
    %36 = vector.shape_cast %35 : vector<1x1x4xf32> to vector<4xf32>
    %37 = vector.extract_strided_slice %34 {offsets = [0, 0, 0, 0], sizes = [1, 16, 16, 4], strides = [1, 1, 1, 1]} : vector<1x18x16x4xf32> to vector<1x16x16x4xf32>
    %38 = vector.shape_cast %36 : vector<4xf32> to vector<1x1x1x4xf32>
    %39 = vector.broadcast %38 : vector<1x1x1x4xf32> to vector<1x16x16x4xf32>
    %40 = arith.mulf %37, %39 : vector<1x16x16x4xf32>
    %41 = arith.addf %33, %40 : vector<1x16x16x4xf32>
    %c1_29 = arith.constant 1 : index
    %c1_30 = arith.constant 1 : index
    %c0_31 = arith.constant 0 : index
    %42 = vector.load %arg6[%c1_29, %c1_30, %c0_31] : memref<3x3x4xf32, #tpu.memory_space<vmem>>, vector<1x1x4xf32>
    %43 = vector.shape_cast %42 : vector<1x1x4xf32> to vector<4xf32>
    %44 = vector.extract_strided_slice %34 {offsets = [0, 1, 0, 0], sizes = [1, 16, 16, 4], strides = [1, 1, 1, 1]} : vector<1x18x16x4xf32> to vector<1x16x16x4xf32>
    %45 = vector.shape_cast %43 : vector<4xf32> to vector<1x1x1x4xf32>
    %46 = vector.broadcast %45 : vector<1x1x1x4xf32> to vector<1x16x16x4xf32>
    %47 = arith.mulf %44, %46 : vector<1x16x16x4xf32>
    %48 = arith.addf %41, %47 : vector<1x16x16x4xf32>
    %c2_32 = arith.constant 2 : index
    %c1_33 = arith.constant 1 : index
    %c0_34 = arith.constant 0 : index
    %49 = vector.load %arg6[%c2_32, %c1_33, %c0_34] : memref<3x3x4xf32, #tpu.memory_space<vmem>>, vector<1x1x4xf32>
    %50 = vector.shape_cast %49 : vector<1x1x4xf32> to vector<4xf32>
    %51 = vector.extract_strided_slice %34 {offsets = [0, 2, 0, 0], sizes = [1, 16, 16, 4], strides = [1, 1, 1, 1]} : vector<1x18x16x4xf32> to vector<1x16x16x4xf32>
    %52 = vector.shape_cast %50 : vector<4xf32> to vector<1x1x1x4xf32>
    %53 = vector.broadcast %52 : vector<1x1x1x4xf32> to vector<1x16x16x4xf32>
    %54 = arith.mulf %51, %53 : vector<1x16x16x4xf32>
    %55 = arith.addf %48, %54 : vector<1x16x16x4xf32>
    %56 = vector.extract_strided_slice %10 {offsets = [0, 0, 2, 0], sizes = [1, 18, 16, 4], strides = [1, 1, 1, 1]} : vector<1x18x18x4xf32> to vector<1x18x16x4xf32>
    %c0_35 = arith.constant 0 : index
    %c2_36 = arith.constant 2 : index
    %c0_37 = arith.constant 0 : index
    %57 = vector.load %arg6[%c0_35, %c2_36, %c0_37] : memref<3x3x4xf32, #tpu.memory_space<vmem>>, vector<1x1x4xf32>
    %58 = vector.shape_cast %57 : vector<1x1x4xf32> to vector<4xf32>
    %59 = vector.extract_strided_slice %56 {offsets = [0, 0, 0, 0], sizes = [1, 16, 16, 4], strides = [1, 1, 1, 1]} : vector<1x18x16x4xf32> to vector<1x16x16x4xf32>
    %60 = vector.shape_cast %58 : vector<4xf32> to vector<1x1x1x4xf32>
    %61 = vector.broadcast %60 : vector<1x1x1x4xf32> to vector<1x16x16x4xf32>
    %62 = arith.mulf %59, %61 : vector<1x16x16x4xf32>
    %63 = arith.addf %55, %62 : vector<1x16x16x4xf32>
    %c1_38 = arith.constant 1 : index
    %c2_39 = arith.constant 2 : index
    %c0_40 = arith.constant 0 : index
    %64 = vector.load %arg6[%c1_38, %c2_39, %c0_40] : memref<3x3x4xf32, #tpu.memory_space<vmem>>, vector<1x1x4xf32>
    %65 = vector.shape_cast %64 : vector<1x1x4xf32> to vector<4xf32>
    %66 = vector.extract_strided_slice %56 {offsets = [0, 1, 0, 0], sizes = [1, 16, 16, 4], strides = [1, 1, 1, 1]} : vector<1x18x16x4xf32> to vector<1x16x16x4xf32>
    %67 = vector.shape_cast %65 : vector<4xf32> to vector<1x1x1x4xf32>
    %68 = vector.broadcast %67 : vector<1x1x1x4xf32> to vector<1x16x16x4xf32>
    %69 = arith.mulf %66, %68 : vector<1x16x16x4xf32>
    %70 = arith.addf %63, %69 : vector<1x16x16x4xf32>
    %c2_41 = arith.constant 2 : index
    %c2_42 = arith.constant 2 : index
    %c0_43 = arith.constant 0 : index
    %71 = vector.load %arg6[%c2_41, %c2_42, %c0_43] : memref<3x3x4xf32, #tpu.memory_space<vmem>>, vector<1x1x4xf32>
    %72 = vector.shape_cast %71 : vector<1x1x4xf32> to vector<4xf32>
    %73 = vector.extract_strided_slice %56 {offsets = [0, 2, 0, 0], sizes = [1, 16, 16, 4], strides = [1, 1, 1, 1]} : vector<1x18x16x4xf32> to vector<1x16x16x4xf32>
    %74 = vector.shape_cast %72 : vector<4xf32> to vector<1x1x1x4xf32>
    %75 = vector.broadcast %74 : vector<1x1x1x4xf32> to vector<1x16x16x4xf32>
    %76 = arith.mulf %73, %75 : vector<1x16x16x4xf32>
    %77 = arith.addf %70, %76 : vector<1x16x16x4xf32>
    %c0_44 = arith.constant 0 : index
    %c0_45 = arith.constant 0 : index
    %78 = vector.load %arg7[%c0_44, %c0_45] : memref<1x4xf32, #tpu.memory_space<vmem>>, vector<1x4xf32>
    %79 = vector.shape_cast %78 : vector<1x4xf32> to vector<4xf32>
    %80 = vector.shape_cast %79 : vector<4xf32> to vector<1x1x1x4xf32>
    %81 = vector.broadcast %80 : vector<1x1x1x4xf32> to vector<1x16x16x4xf32>
    %82 = arith.addf %77, %81 : vector<1x16x16x4xf32>
    %83 = arith.maximumf %0, %82 : vector<1x16x16x4xf32>
    %c0_46 = arith.constant 0 : index
    %c0_47 = arith.constant 0 : index
    %c0_48 = arith.constant 0 : index
    %c0_49 = arith.constant 0 : index
    %84 = vector.load %arg8[%c0_46, %c0_47, %c0_48, %c0_49] : memref<1x16x16x4xf32, #tpu.memory_space<vmem>>, vector<1x16x16x4xf32>
    tpu.vector_store %arg8[%c0_46, %c0_47, %c0_48, %c0_49], %83 {strides = array<i32>} : memref<1x16x16x4xf32, #tpu.memory_space<vmem>>, vector<1x16x16x4xf32>,
    return
  }
  func.func @transform_0(%arg0: i32, %arg1: i32, %arg2: i32) -> (i32, i32, i32, i32) {
    %c0_i32 = arith.constant 0 : i32
    %c0_i32_0 = arith.constant 0 : i32
    return %arg0, %arg1, %c0_i32, %arg2 : i32, i32, i32, i32
  }
  func.func @transform_1(%arg0: i32, %arg1: i32, %arg2: i32) -> (i32, i32, i32, i32) {
    %c16_i32 = arith.constant 16 : i32
    %0 = arith.muli %arg1, %c16_i32 : i32
    %c1_i32 = arith.constant 1 : i32
    %1 = arith.subi %0, %c1_i32 : i32
    %c0_i32 = arith.constant 0 : i32
    %2 = arith.maxsi %1, %c0_i32 : i32
    %c0_i32_0 = arith.constant 0 : i32
    %c0_i32_1 = arith.constant 0 : i32
    return %arg0, %2, %c0_i32_0, %arg2 : i32, i32, i32, i32
  }
  func.func @transform_2(%arg0: i32, %arg1: i32, %arg2: i32) -> (i32, i32, i32, i32) {
    %c16_i32 = arith.constant 16 : i32
    %0 = arith.muli %arg1, %c16_i32 : i32
    %c16_i32_0 = arith.constant 16 : i32
    %1 = arith.addi %0, %c16_i32_0 : i32
    %c15_i32 = arith.constant 15 : i32
    %2 = arith.minsi %1, %c15_i32 : i32
    %c0_i32 = arith.constant 0 : i32
    %c0_i32_1 = arith.constant 0 : i32
    return %arg0, %2, %c0_i32, %arg2 : i32, i32, i32, i32
  }
  func.func @transform_3(%arg0: i32, %arg1: i32, %arg2: i32) -> (i32, i32, i32) {
    %c0_i32 = arith.constant 0 : i32
    %c0_i32_0 = arith.constant 0 : i32
    %c0_i32_1 = arith.constant 0 : i32
    return %c0_i32, %c0_i32_0, %arg2 : i32, i32, i32
  }
  func.func @transform_4(%arg0: i32, %arg1: i32, %arg2: i32) -> (i32, i32) {
    %c0_i32 = arith.constant 0 : i32
    %c0_i32_0 = arith.constant 0 : i32
    return %c0_i32, %arg2 : i32, i32
  }
  func.func @transform_5(%arg0: i32, %arg1: i32, %arg2: i32) -> (i32, i32, i32, i32) {
    %c0_i32 = arith.constant 0 : i32
    %c0_i32_0 = arith.constant 0 : i32
    return %arg0, %arg1, %c0_i32, %arg2 : i32, i32, i32, i32
  }
}

</mosaic_0001>

<llo_original>
// kernel: tpu_custom_call.1
$region0: #{tpu_custom_call.1}
  #allocation0 [shape = 'u32[]', space=smem, size = 0x4, offset = 0x4, fixed_abs, tag = 'smem constant byte address 0x4 - core index']
  #allocation1 [shape = 'u32[144,128]{1,0:T(1,128)}', space=vmem, size = 0x12000, scoped, tag = 'internal scratch']
  #allocation2 [shape = 'f32[1,18,18,4]{3,2,1,0:T(8,128)}', space=vmem, size = 0x36000, scoped, tag = 'scratch operand']
  %s0 = inlined_call_operand.vmem [shape: f32[2,16,16,4], index: 0, kind: input, shape index: {}]
  %s1 = inlined_call_operand.vmem [shape: f32[2,16,16,4], index: 1, kind: input, shape index: {}]
  %s2 = inlined_call_operand.vmem [shape: f32[2,16,16,4], index: 2, kind: input, shape index: {}]
  %s3 = inlined_call_operand.vmem [shape: f32[3,3,4], index: 3, kind: input, shape index: {}]
  %s4 = inlined_call_operand.vmem [shape: f32[1,4], index: 4, kind: input, shape index: {}]
  %s5 = inlined_call_operand.vmem [shape: f32[2,16,16,4], index: 5, kind: output, shape index: {}]
  %s6 = sld [smem:[#allocation0]]
  $region61: #{tpu_custom_call.1} parent=0
    _
  %s8 = ssub.s32 1, %s6
  %s9 = scalar_select 0, %s8, %s6
  loop: start=0, step=1, limit=4
  $region2: #{tpu_custom_call.1} parent=0 // loop_pre_header
    _
  $region3: #{tpu_custom_call.1} parent=0 // loop_header
    %s11 = sphi 0, %s15
    %p12 = scmp.ge.s32.totalorder %s11, 4
    %s18 = sphi 0, %s37
    %s19 = sphi 0, %s33
    %s20 = sphi 0, %s29
    %s21 = sphi 0, %s18
    %s22 = sphi 0, %s19
    %s23 = sphi 0, %s20
    %s24 = sphi 0, %s21
    %s25 = sphi 0, %s22
    %s26 = sphi 0, %s23
    %s44 = sphi 0, %s46
    %s47 = sphi 0, %s44
    %s48 = sphi 0, %s47
    %s64 = sphi 0, %s48
    %s82 = sphi 0, %s84
    %s85 = sphi 0, %s82
    %s86 = sphi 0, %s85
    %s102 = sphi 0, %s86
    %s120 = sphi 0, %s122
    %s123 = sphi 0, %s120
    %s124 = sphi 0, %s123
    %s140 = sphi 0, %s124
    %s146 = sphi 0, %s148
    %s149 = sphi 0, %s146
    %s150 = sphi 0, %s149
    %s166 = sphi 0, %s150
    %s172 = sphi 0, %s174
    %s175 = sphi 0, %s172
    %s176 = sphi 0, %s175
    %s192 = sphi 0, %s176
    %s202 = sphi 0, %s204
    %s205 = sphi 0, %s202
    %s206 = sphi 0, %s205
    %s222 = sphi 0, %s206
  $region4: #{tpu_custom_call.1} parent=0 // loop_header_branch
    %14 = sbr.rel (%p12) target = $region8
  $region5: #{tpu_custom_call.1} parent=0 // loop_body
    %s16 = ssub.s32 %s11, 1
    %s17 = ssub.s32 %s11, 2
    %s27 = sadd.s32 1, %s20
    %p28 = scmp.ge.s32.totalorder %s27, 1
    %s29 = scalar_select %p28, 0, %s27
    %s30 = sadd.s32 1, %s19
    %s31 = scalar_select %p28, %s30, %s19
    %p32 = scmp.ge.s32.totalorder %s31, 1
    %s33 = scalar_select %p32, 0, %s31
    %s34 = sadd.s32 1, %s18
    %s35 = scalar_select %p32, %s34, %s18
    %p36 = scmp.ge.s32.totalorder %s35, 2
    %s37 = scalar_select %p36, 0, %s35
    %s38 = ssub.s32 %s18, %s37
    %s39 = ssub.s32 %s19, %s33
    %s40 = sor.u32 %s38, %s39
    %s41 = ssub.s32 %s20, %s29
    %s42 = sor.u32 %s40, %s41
    %p43 = scmp.eq.s32.totalorder %s42, 0
    %s45 = sadd.s32 %s44, 1
    %s46 = scalar_select %p43, %s44, %s45
    %p49 = pneg %p43
    %p50 = scmp.eq.s32.totalorder %s11, 1
    %p51 = por %p49, %p50
    %p52 = scmp.ne.s32.totalorder %s44, %s47
    %p53 = scmp.eq.s32.totalorder %s11, 0
    %p54 = por %p52, %p53
    %p55 = scmp.ne.s32.totalorder %s44, %s47
    %p56 = scmp.eq.s32.totalorder %s16, 1
    %p57 = por %p55, %p56
    %p58 = scmp.ne.s32.totalorder %s47, %s48
    %p59 = scmp.eq.s32.totalorder %s16, 0
    %p60 = por %p58, %p59
    %p61 = scmp.ne.s32.totalorder %s47, %s48
    %p62 = scmp.eq.s32.totalorder %s17, 1
    %p63 = por %p61, %p62
    %p65 = scmp.ne.s32.totalorder %s48, %s64
    %p66 = scmp.eq.s32.totalorder %s17, 0
    %p67 = por %p65, %p66
    %s68 = smul.u32 %s19, 16
    %s69 = ssub.s32 %s68, 1
    %p70 = scmp.gt.s32.totalorder %s69, 0
    %s71 = scalar_select %p70, %s69, 0
    %s72 = smul.u32 %s33, 16
    %s73 = ssub.s32 %s72, 1
    %p74 = scmp.gt.s32.totalorder %s73, 0
    %s75 = scalar_select %p74, %s73, 0
    %s76 = ssub.s32 %s18, %s37
    %s77 = ssub.s32 %s71, %s75
    %s78 = sor.u32 %s76, %s77
    %s79 = ssub.s32 %s20, %s29
    %s80 = sor.u32 %s78, %s79
    %p81 = scmp.eq.s32.totalorder %s80, 0
    %s83 = sadd.s32 %s82, 1
    %s84 = scalar_select %p81, %s82, %s83
    %p87 = pneg %p81
    %p88 = scmp.eq.s32.totalorder %s11, 1
    %p89 = por %p87, %p88
    %p90 = scmp.ne.s32.totalorder %s82, %s85
    %p91 = scmp.eq.s32.totalorder %s11, 0
    %p92 = por %p90, %p91
    %p93 = scmp.ne.s32.totalorder %s82, %s85
    %p94 = scmp.eq.s32.totalorder %s16, 1
    %p95 = por %p93, %p94
    %p96 = scmp.ne.s32.totalorder %s85, %s86
    %p97 = scmp.eq.s32.totalorder %s16, 0
    %p98 = por %p96, %p97
    %p99 = scmp.ne.s32.totalorder %s85, %s86
    %p100 = scmp.eq.s32.totalorder %s17, 1
    %p101 = por %p99, %p100
    %p103 = scmp.ne.s32.totalorder %s86, %s102
    %p104 = scmp.eq.s32.totalorder %s17, 0
    %p105 = por %p103, %p104
    %s106 = smul.u32 %s19, 16
    %s107 = sadd.s32 %s106, 16
    %p108 = scmp.lt.s32.totalorder %s107, 15
    %s109 = scalar_select %p108, %s107, 15
    %s110 = smul.u32 %s33, 16
    %s111 = sadd.s32 %s110, 16
    %p112 = scmp.lt.s32.totalorder %s111, 15
    %s113 = scalar_select %p112, %s111, 15
    %s114 = ssub.s32 %s18, %s37
    %s115 = ssub.s32 %s109, %s113
    %s116 = sor.u32 %s114, %s115
    %s117 = ssub.s32 %s20, %s29
    %s118 = sor.u32 %s116, %s117
    %p119 = scmp.eq.s32.totalorder %s118, 0
    %s121 = sadd.s32 %s120, 1
    %s122 = scalar_select %p119, %s120, %s121
    %p125 = pneg %p119
    %p126 = scmp.eq.s32.totalorder %s11, 1
    %p127 = por %p125, %p126
    %p128 = scmp.ne.s32.totalorder %s120, %s123
    %p129 = scmp.eq.s32.totalorder %s11, 0
    %p130 = por %p128, %p129
    %p131 = scmp.ne.s32.totalorder %s120, %s123
    %p132 = scmp.eq.s32.totalorder %s16, 1
    %p133 = por %p131, %p132
    %p134 = scmp.ne.s32.totalorder %s123, %s124
    %p135 = scmp.eq.s32.totalorder %s16, 0
    %p136 = por %p134, %p135
    %p137 = scmp.ne.s32.totalorder %s123, %s124
    %p138 = scmp.eq.s32.totalorder %s17, 1
    %p139 = por %p137, %p138
    %p141 = scmp.ne.s32.totalorder %s124, %s140
    %p142 = scmp.eq.s32.totalorder %s17, 0
    %p143 = por %p141, %p142
    %s144 = ssub.s32 %s20, %s29
    %p145 = scmp.eq.s32.totalorder %s144, 0
    %s147 = sadd.s32 %s146, 1
    %s148 = scalar_select %p145, %s146, %s147
    %p151 = pneg %p145
    %p152 = scmp.eq.s32.totalorder %s11, 1
    %p153 = por %p151, %p152
    %p154 = scmp.ne.s32.totalorder %s146, %s149
    %p155 = scmp.eq.s32.totalorder %s11, 0
    %p156 = por %p154, %p155
    %p157 = scmp.ne.s32.totalorder %s146, %s149
    %p158 = scmp.eq.s32.totalorder %s16, 1
    %p159 = por %p157, %p158
    %p160 = scmp.ne.s32.totalorder %s149, %s150
    %p161 = scmp.eq.s32.totalorder %s16, 0
    %p162 = por %p160, %p161
    %p163 = scmp.ne.s32.totalorder %s149, %s150
    %p164 = scmp.eq.s32.totalorder %s17, 1
    %p165 = por %p163, %p164
    %p167 = scmp.ne.s32.totalorder %s150, %s166
    %p168 = scmp.eq.s32.totalorder %s17, 0
    %p169 = por %p167, %p168
    %s170 = ssub.s32 %s20, %s29
    %p171 = scmp.eq.s32.totalorder %s170, 0
    %s173 = sadd.s32 %s172, 1
    %s174 = scalar_select %p171, %s172, %s173
    %p177 = pneg %p171
    %p178 = scmp.eq.s32.totalorder %s11, 1
    %p179 = por %p177, %p178
    %p180 = scmp.ne.s32.totalorder %s172, %s175
    %p181 = scmp.eq.s32.totalorder %s11, 0
    %p182 = por %p180, %p181
    %p183 = scmp.ne.s32.totalorder %s172, %s175
    %p184 = scmp.eq.s32.totalorder %s16, 1
    %p185 = por %p183, %p184
    %p186 = scmp.ne.s32.totalorder %s175, %s176
    %p187 = scmp.eq.s32.totalorder %s16, 0
    %p188 = por %p186, %p187
    %p189 = scmp.ne.s32.totalorder %s175, %s176
    %p190 = scmp.eq.s32.totalorder %s17, 1
    %p191 = por %p189, %p190
    %p193 = scmp.ne.s32.totalorder %s176, %s192
    %p194 = scmp.eq.s32.totalorder %s17, 0
    %p195 = por %p193, %p194
    %s196 = ssub.s32 %s18, %s37
    %s197 = ssub.s32 %s19, %s33
    %s198 = sor.u32 %s196, %s197
    %s199 = ssub.s32 %s20, %s29
    %s200 = sor.u32 %s198, %s199
    %p201 = scmp.eq.s32.totalorder %s200, 0
    %s203 = sadd.s32 %s202, 1
    %s204 = scalar_select %p201, %s202, %s203
    %p207 = pneg %p201
    %p208 = scmp.eq.s32.totalorder %s11, 1
    %p209 = por %p207, %p208
    %p210 = scmp.ne.s32.totalorder %s202, %s205
    %p211 = scmp.eq.s32.totalorder %s11, 0
    %p212 = por %p210, %p211
    %p213 = scmp.ne.s32.totalorder %s202, %s205
    %p214 = scmp.eq.s32.totalorder %s16, 1
    %p215 = por %p213, %p214
    %p216 = scmp.ne.s32.totalorder %s205, %s206
    %p217 = scmp.eq.s32.totalorder %s16, 0
    %p218 = por %p216, %p217
    %p219 = scmp.ne.s32.totalorder %s205, %s206
    %p220 = scmp.eq.s32.totalorder %s17, 1
    %p221 = por %p219, %p220
    %p223 = scmp.ne.s32.totalorder %s206, %s222
    %p224 = scmp.eq.s32.totalorder %s17, 0
    %p225 = por %p223, %p224
    %p226 = scmp.le.s32.totalorder 1, %s11
    %p227 = scmp.lt.s32.totalorder %s11, 3
    %p228 = pnand %p226, %p227
    %p229 = pneg %p228
    // Predicated region
    $region9: #{tpu_custom_call.1} parent=5 // pred_check
      _
    $region10: #{tpu_custom_call.1} parent=5 // pred_check_branch
      %231 = sbr.rel (%p228) target = $region12
    $region11: #{tpu_custom_call.1} parent=5 // pred_region
      %s232 = ssub.s32 %s11, 1
      // Predicated region
      $region13: #{tpu_custom_call.1} parent=11 // pred_check
        %p233 = pneg %p162
      $region14: #{tpu_custom_call.1} parent=11 // pred_check_branch
        %235 = sbr.rel (%p233) target = $region16
      $region15: #{tpu_custom_call.1} parent=11 // pred_region
        %p236 = scmp.lt.s32.totalorder %s23, 0
        %s237 = scalar_select %p236, %s23, 0
        %s238 = smul.addr %s237, 4
        %s239 = scalar_lea.vmem %s3, %s238
      $region16: #{tpu_custom_call.1} parent=11 // pred_fallthru
        _
      // Predicated region
      $region17: #{tpu_custom_call.1} parent=11 // pred_check
        %p240 = pneg %p188
      $region18: #{tpu_custom_call.1} parent=11 // pred_check_branch
        %242 = sbr.rel (%p240) target = $region20
      $region19: #{tpu_custom_call.1} parent=11 // pred_region
        %p243 = scmp.lt.s32.totalorder %s23, 0
        %s244 = scalar_select %p243, %s23, 0
        %s245 = scalar_lea.vmem %s4, %s244
      $region20: #{tpu_custom_call.1} parent=11 // pred_fallthru
        _
    $region12: #{tpu_custom_call.1} parent=5 // pred_fallthru
      _
    %p246 = scmp.lt.s32.totalorder %s11, 2
    // Predicated region
    $region21: #{tpu_custom_call.1} parent=5 // pred_check
      %p247 = pneg %p246
    $region22: #{tpu_custom_call.1} parent=5 // pred_check_branch
      %249 = sbr.rel (%p247) target = $region24
    $region23: #{tpu_custom_call.1} parent=5 // pred_region
      // Predicated region
      $region25: #{tpu_custom_call.1} parent=23 // pred_check
        %p250 = pneg %p54
      $region26: #{tpu_custom_call.1} parent=23 // pred_check_branch
        %252 = sbr.rel (%p250) target = $region28
      $region27: #{tpu_custom_call.1} parent=23 // pred_region
        %s253 = smul.u32 16, %s19
        %p254 = scmp.lt.s32.totalorder %s18, 1
        %s255 = scalar_select %p254, %s18, 1
        %p256 = scmp.lt.s32.totalorder %s253, 15
        %s257 = scalar_select %p256, %s253, 15
        %p258 = scmp.lt.s32.totalorder %s20, 0
        %s259 = scalar_select %p258, %s20, 0
        %s260 = smul.addr %s257, 2
        %s261 = sadd.s32 %s259, %s260
        %s262 = smul.addr %s255, 32
        %s263 = sadd.s32 %s261, %s262
        %s264 = smul.addr %s263, 8
        %s265 = scalar_lea.vmem %s0, %s264
        %s266 = smul.u32 16, %s19
      $region28: #{tpu_custom_call.1} parent=23 // pred_fallthru
        _
      // Predicated region
      $region29: #{tpu_custom_call.1} parent=23 // pred_check
        %p267 = pneg %p92
      $region30: #{tpu_custom_call.1} parent=23 // pred_check_branch
        %269 = sbr.rel (%p267) target = $region32
      $region31: #{tpu_custom_call.1} parent=23 // pred_region
        %s270 = smul.u32 %s19, 16
        %s271 = ssub.s32 %s270, 1
        %p272 = scmp.gt.s32.totalorder %s271, 0
        %s273 = scalar_select %p272, %s271, 0
        %p274 = scmp.lt.s32.totalorder %s18, 1
        %s275 = scalar_select %p274, %s18, 1
        %p276 = scmp.lt.s32.totalorder %s273, 15
        %s277 = scalar_select %p276, %s273, 15
        %p278 = scmp.lt.s32.totalorder %s20, 0
        %s279 = scalar_select %p278, %s20, 0
        %s280 = smul.addr %s277, 2
        %s281 = sadd.s32 %s279, %s280
        %s282 = smul.addr %s275, 32
        %s283 = sadd.s32 %s281, %s282
        %s284 = smul.addr %s283, 8
        %s285 = scalar_lea.vmem %s1, %s284
        %s286 = smul.u32 %s19, 16
        %s287 = ssub.s32 %s286, 1
        %p288 = scmp.gt.s32.totalorder %s287, 0
        %s289 = scalar_select %p288, %s287, 0
      $region32: #{tpu_custom_call.1} parent=23 // pred_fallthru
        _
      // Predicated region
      $region33: #{tpu_custom_call.1} parent=23 // pred_check
        %p290 = pneg %p130
      $region34: #{tpu_custom_call.1} parent=23 // pred_check_branch
        %292 = sbr.rel (%p290) target = $region36
      $region35: #{tpu_custom_call.1} parent=23 // pred_region
        %s293 = smul.u32 %s19, 16
        %s294 = sadd.s32 %s293, 16
        %p295 = scmp.lt.s32.totalorder %s294, 15
        %s296 = scalar_select %p295, %s294, 15
        %p297 = scmp.lt.s32.totalorder %s18, 1
        %s298 = scalar_select %p297, %s18, 1
        %p299 = scmp.lt.s32.totalorder %s296, 15
        %s300 = scalar_select %p299, %s296, 15
        %p301 = scmp.lt.s32.totalorder %s20, 0
        %s302 = scalar_select %p301, %s20, 0
        %s303 = smul.addr %s300, 2
        %s304 = sadd.s32 %s302, %s303
        %s305 = smul.addr %s298, 32
        %s306 = sadd.s32 %s304, %s305
        %s307 = smul.addr %s306, 8
        %s308 = scalar_lea.vmem %s2, %s307
        %s309 = smul.u32 %s19, 16
        %s310 = sadd.s32 %s309, 16
        %p311 = scmp.lt.s32.totalorder %s310, 15
        %s312 = scalar_select %p311, %s310, 15
      $region36: #{tpu_custom_call.1} parent=23 // pred_fallthru
        _
    $region24: #{tpu_custom_call.1} parent=5 // pred_fallthru
      _
    %p313 = scmp.le.s32.totalorder 1, %s11
    %p314 = scmp.lt.s32.totalorder %s11, 3
    %p315 = pnand %p313, %p314
    %p316 = pneg %p315
    // Predicated region
    $region37: #{tpu_custom_call.1} parent=5 // pred_check
      _
    $region38: #{tpu_custom_call.1} parent=5 // pred_check_branch
      %318 = sbr.rel (%p315) target = $region40
    $region39: #{tpu_custom_call.1} parent=5 // pred_region
      %s319 = ssub.s32 %s11, 1
      %s320 = smul.u32 16, %s22
      %p321 = scmp.lt.s32.totalorder %s21, 1
      %s322 = scalar_select %p321, %s21, 1
      %p323 = scmp.lt.s32.totalorder %s320, 15
      %s324 = scalar_select %p323, %s320, 15
      %p325 = scmp.lt.s32.totalorder %s23, 0
      %s326 = scalar_select %p325, %s23, 0
      %s327 = smul.addr %s324, 2
      %s328 = sadd.s32 %s326, %s327
      %s329 = smul.addr %s322, 32
      %s330 = sadd.s32 %s328, %s329
      %s331 = smul.addr %s330, 8
      %s332 = scalar_lea.vmem %s0, %s331
      %p333 = pneg %p60
      %p334 = pneg %p57
      %s335 = smul.u32 %s22, 16
      %s336 = ssub.s32 %s335, 1
      %p337 = scmp.gt.s32.totalorder %s336, 0
      %s338 = scalar_select %p337, %s336, 0
      %p339 = scmp.lt.s32.totalorder %s21, 1
      %s340 = scalar_select %p339, %s21, 1
      %p341 = scmp.lt.s32.totalorder %s338, 15
      %s342 = scalar_select %p341, %s338, 15
      %p343 = scmp.lt.s32.totalorder %s23, 0
      %s344 = scalar_select %p343, %s23, 0
      %s345 = smul.addr %s342, 2
      %s346 = sadd.s32 %s344, %s345
      %s347 = smul.addr %s340, 32
      %s348 = sadd.s32 %s346, %s347
      %s349 = smul.addr %s348, 8
      %s350 = scalar_lea.vmem %s1, %s349
      %p351 = pneg %p98
      %p352 = pneg %p95
      %s353 = smul.u32 %s22, 16
      %s354 = sadd.s32 %s353, 16
      %p355 = scmp.lt.s32.totalorder %s354, 15
      %s356 = scalar_select %p355, %s354, 15
      %p357 = scmp.lt.s32.totalorder %s21, 1
      %s358 = scalar_select %p357, %s21, 1
      %p359 = scmp.lt.s32.totalorder %s356, 15
      %s360 = scalar_select %p359, %s356, 15
      %p361 = scmp.lt.s32.totalorder %s23, 0
      %s362 = scalar_select %p361, %s23, 0
      %s363 = smul.addr %s360, 2
      %s364 = sadd.s32 %s362, %s363
      %s365 = smul.addr %s358, 32
      %s366 = sadd.s32 %s364, %s365
      %s367 = smul.addr %s366, 8
      %s368 = scalar_lea.vmem %s2, %s367
      %p369 = pneg %p136
      %p370 = pneg %p133
      %p371 = scmp.lt.s32.totalorder %s23, 0
      %s372 = scalar_select %p371, %s23, 0
      %s373 = smul.addr %s372, 4
      %s374 = scalar_lea.vmem %s3, %s373
      %p375 = pneg %p162
      %p376 = pneg %p159
      %p377 = scmp.lt.s32.totalorder %s23, 0
      %s378 = scalar_select %p377, %s23, 0
      %s379 = scalar_lea.vmem %s4, %s378
      %p380 = pneg %p188
      %p381 = pneg %p185
      %p382 = pneg %p218
      %p383 = pneg %p215
      %s384 = smul.u32 16, %s22
      %p385 = scmp.lt.s32.totalorder %s21, 1
      %s386 = scalar_select %p385, %s21, 1
      %p387 = scmp.lt.s32.totalorder %s384, 15
      %s388 = scalar_select %p387, %s384, 15
      %p389 = scmp.lt.s32.totalorder %s23, 0
      %s390 = scalar_select %p389, %s23, 0
      %s391 = smul.addr %s388, 2
      %s392 = sadd.s32 %s390, %s391
      %s393 = smul.addr %s386, 32
      %s394 = sadd.s32 %s392, %s393
      %s395 = smul.addr %s394, 8
      %s396 = scalar_lea.vmem %s5, %s395
      %s397 = smul.u32 16, %s22
      %p398 = scmp.lt.s32.totalorder %s21, 1
      %s399 = scalar_select %p398, %s21, 1
      %p400 = scmp.lt.s32.totalorder %s397, 15
      %s401 = scalar_select %p400, %s397, 15
      %p402 = scmp.lt.s32.totalorder %s23, 0
      %s403 = scalar_select %p402, %s23, 0
      %s404 = smul.addr %s401, 2
      %s405 = sadd.s32 %s403, %s404
      %s406 = smul.addr %s399, 32
      %s407 = sadd.s32 %s405, %s406
      %s408 = smul.addr %s407, 8
      %s409 = scalar_lea.vmem %s0, %s408
      %s410 = smul.u32 16, %s22
      %s411 = smul.u32 %s22, 16
      %s412 = ssub.s32 %s411, 1
      %p413 = scmp.gt.s32.totalorder %s412, 0
      %s414 = scalar_select %p413, %s412, 0
      %p415 = scmp.lt.s32.totalorder %s21, 1
      %s416 = scalar_select %p415, %s21, 1
      %p417 = scmp.lt.s32.totalorder %s414, 15
      %s418 = scalar_select %p417, %s414, 15
      %p419 = scmp.lt.s32.totalorder %s23, 0
      %s420 = scalar_select %p419, %s23, 0
      %s421 = smul.addr %s418, 2
      %s422 = sadd.s32 %s420, %s421
      %s423 = smul.addr %s416, 32
      %s424 = sadd.s32 %s422, %s423
      %s425 = smul.addr %s424, 8
      %s426 = scalar_lea.vmem %s1, %s425
      %s427 = smul.u32 %s22, 16
      %s428 = ssub.s32 %s427, 1
      %p429 = scmp.gt.s32.totalorder %s428, 0
      %s430 = scalar_select %p429, %s428, 0
      %s431 = smul.u32 %s22, 16
      %s432 = sadd.s32 %s431, 16
      %p433 = scmp.lt.s32.totalorder %s432, 15
      %s434 = scalar_select %p433, %s432, 15
      %p435 = scmp.lt.s32.totalorder %s21, 1
      %s436 = scalar_select %p435, %s21, 1
      %p437 = scmp.lt.s32.totalorder %s434, 15
      %s438 = scalar_select %p437, %s434, 15
      %p439 = scmp.lt.s32.totalorder %s23, 0
      %s440 = scalar_select %p439, %s23, 0
      %s441 = smul.addr %s438, 2
      %s442 = sadd.s32 %s440, %s441
      %s443 = smul.addr %s436, 32
      %s444 = sadd.s32 %s442, %s443
      %s445 = smul.addr %s444, 8
      %s446 = scalar_lea.vmem %s2, %s445
      %s447 = smul.u32 %s22, 16
      %s448 = sadd.s32 %s447, 16
      %p449 = scmp.lt.s32.totalorder %s448, 15
      %s450 = scalar_select %p449, %s448, 15
      %p451 = scmp.lt.s32.totalorder %s23, 0
      %s452 = scalar_select %p451, %s23, 0
      %s453 = smul.addr %s452, 4
      %s454 = scalar_lea.vmem %s3, %s453
      %p455 = scmp.lt.s32.totalorder %s23, 0
      %s456 = scalar_select %p455, %s23, 0
      %s457 = scalar_lea.vmem %s4, %s456
      %s458 = smul.u32 16, %s22
      %p459 = scmp.lt.s32.totalorder %s21, 1
      %s460 = scalar_select %p459, %s21, 1
      %p461 = scmp.lt.s32.totalorder %s458, 15
      %s462 = scalar_select %p461, %s458, 15
      %p463 = scmp.lt.s32.totalorder %s23, 0
      %s464 = scalar_select %p463, %s23, 0
      %s465 = smul.addr %s462, 2
      %s466 = sadd.s32 %s464, %s465
      %s467 = smul.addr %s460, 32
      %s468 = sadd.s32 %s466, %s467
      %s469 = smul.addr %s468, 8
      %s470 = scalar_lea.vmem %s5, %s469
      %s471 = smul.u32 16, %s22
      %v472 = vld [vmem:[%s409] sm:$0xff]
      %v473 = vld [vmem:[%s409 + $0x8] sm:$0xff]
      %v474 = vld [vmem:[%s409 + $0x10] sm:$0xff]
      %v475 = vld [vmem:[%s409 + $0x18] sm:$0xff]
      %v476 = vld [vmem:[%s409 + $0x20] sm:$0xff]
      %v477 = vld [vmem:[%s409 + $0x28] sm:$0xff]
      %v478 = vld [vmem:[%s409 + $0x30] sm:$0xff]
      %v479 = vld [vmem:[%s409 + $0x38] sm:$0xff]
      %v480 = vld [vmem:[%s409 + $0x40] sm:$0xff]
      %v481 = vld [vmem:[%s409 + $0x48] sm:$0xff]
      %v482 = vld [vmem:[%s409 + $0x50] sm:$0xff]
      %v483 = vld [vmem:[%s409 + $0x58] sm:$0xff]
      %v484 = vld [vmem:[%s409 + $0x60] sm:$0xff]
      %v485 = vld [vmem:[%s409 + $0x68] sm:$0xff]
      %v486 = vld [vmem:[%s409 + $0x70] sm:$0xff]
      %v487 = vld [vmem:[%s409 + $0x78] sm:$0xff]
      %v488 = vld [vmem:[%s409 + $0x80] sm:$0xff]
      %v489 = vld [vmem:[%s409 + $0x88] sm:$0xff]
      %v490 = vld [vmem:[%s409 + $0x90] sm:$0xff]
      %v491 = vld [vmem:[%s409 + $0x98] sm:$0xff]
      %v492 = vld [vmem:[%s409 + $0xa0] sm:$0xff]
      %v493 = vld [vmem:[%s409 + $0xa8] sm:$0xff]
      %v494 = vld [vmem:[%s409 + $0xb0] sm:$0xff]
      %v495 = vld [vmem:[%s409 + $0xb8] sm:$0xff]
      %v496 = vld [vmem:[%s409 + $0xc0] sm:$0xff]
      %v497 = vld [vmem:[%s409 + $0xc8] sm:$0xff]
      %v498 = vld [vmem:[%s409 + $0xd0] sm:$0xff]
      %v499 = vld [vmem:[%s409 + $0xd8] sm:$0xff]
      %v500 = vld [vmem:[%s409 + $0xe0] sm:$0xff]
      %v501 = vld [vmem:[%s409 + $0xe8] sm:$0xff]
      %v502 = vld [vmem:[%s409 + $0xf0] sm:$0xff]
      %v503 = vld [vmem:[%s409 + $0xf8] sm:$0xff]
      %vm504 = vcmask 31744
      %505 = vst.msk [vmem:[#allocation2] sm:$0xff] %vm504, 0.0
      %506 = vst.msk [vmem:[#allocation2 + $0x8] sm:$0xff] %vm504, 0.0
      %vm507 = vcmask 25600
      %508 = vst.msk [vmem:[#allocation2 + $0x10] sm:$0x3] %vm507, 0.0
      %509 = vst.msk [vmem:[#allocation2 + $0x18] sm:$0xff] %vm504, 0.0
      %510 = vst.msk [vmem:[#allocation2 + $0x20] sm:$0xff] %vm504, 0.0
      %511 = vst.msk [vmem:[#allocation2 + $0x28] sm:$0x3] %vm507, 0.0
      %512 = vst.msk [vmem:[#allocation2 + $0x30] sm:$0xff] %vm504, 0.0
      %513 = vst.msk [vmem:[#allocation2 + $0x38] sm:$0xff] %vm504, 0.0
      %514 = vst.msk [vmem:[#allocation2 + $0x40] sm:$0x3] %vm507, 0.0
      %515 = vst.msk [vmem:[#allocation2 + $0x48] sm:$0xff] %vm504, 0.0
      %516 = vst.msk [vmem:[#allocation2 + $0x50] sm:$0xff] %vm504, 0.0
      %517 = vst.msk [vmem:[#allocation2 + $0x58] sm:$0x3] %vm507, 0.0
      %518 = vst.msk [vmem:[#allocation2 + $0x60] sm:$0xff] %vm504, 0.0
      %519 = vst.msk [vmem:[#allocation2 + $0x68] sm:$0xff] %vm504, 0.0
      %520 = vst.msk [vmem:[#allocation2 + $0x70] sm:$0x3] %vm507, 0.0
      %521 = vst.msk [vmem:[#allocation2 + $0x78] sm:$0xff] %vm504, 0.0
      %522 = vst.msk [vmem:[#allocation2 + $0x80] sm:$0xff] %vm504, 0.0
      %523 = vst.msk [vmem:[#allocation2 + $0x88] sm:$0x3] %vm507, 0.0
      %524 = vst.msk [vmem:[#allocation2 + $0x90] sm:$0xff] %vm504, 0.0
      %525 = vst.msk [vmem:[#allocation2 + $0x98] sm:$0xff] %vm504, 0.0
      %526 = vst.msk [vmem:[#allocation2 + $0xa0] sm:$0x3] %vm507, 0.0
      %527 = vst.msk [vmem:[#allocation2 + $0xa8] sm:$0xff] %vm504, 0.0
      %528 = vst.msk [vmem:[#allocation2 + $0xb0] sm:$0xff] %vm504, 0.0
      %529 = vst.msk [vmem:[#allocation2 + $0xb8] sm:$0x3] %vm507, 0.0
      %530 = vst.msk [vmem:[#allocation2 + $0xc0] sm:$0xff] %vm504, 0.0
      %531 = vst.msk [vmem:[#allocation2 + $0xc8] sm:$0xff] %vm504, 0.0
      %532 = vst.msk [vmem:[#allocation2 + $0xd0] sm:$0x3] %vm507, 0.0
      %533 = vst.msk [vmem:[#allocation2 + $0xd8] sm:$0xff] %vm504, 0.0
      %534 = vst.msk [vmem:[#allocation2 + $0xe0] sm:$0xff] %vm504, 0.0
      %535 = vst.msk [vmem:[#allocation2 + $0xe8] sm:$0x3] %vm507, 0.0
      %536 = vst.msk [vmem:[#allocation2 + $0xf0] sm:$0xff] %vm504, 0.0
      %537 = vst.msk [vmem:[#allocation2 + $0xf8] sm:$0xff] %vm504, 0.0
      %538 = vst.msk [vmem:[#allocation2 + $0x100] sm:$0x3] %vm507, 0.0
      %539 = vst.msk [vmem:[#allocation2 + $0x108] sm:$0xff] %vm504, 0.0
      %540 = vst.msk [vmem:[#allocation2 + $0x110] sm:$0xff] %vm504, 0.0
      %541 = vst.msk [vmem:[#allocation2 + $0x118] sm:$0x3] %vm507, 0.0
      %542 = vst.msk [vmem:[#allocation2 + $0x120] sm:$0xff] %vm504, 0.0
      %543 = vst.msk [vmem:[#allocation2 + $0x128] sm:$0xff] %vm504, 0.0
      %544 = vst.msk [vmem:[#allocation2 + $0x130] sm:$0x3] %vm507, 0.0
      %545 = vst.msk [vmem:[#allocation2 + $0x138] sm:$0xff] %vm504, 0.0
      %546 = vst.msk [vmem:[#allocation2 + $0x140] sm:$0xff] %vm504, 0.0
      %547 = vst.msk [vmem:[#allocation2 + $0x148] sm:$0x3] %vm507, 0.0
      %548 = vst.msk [vmem:[#allocation2 + $0x150] sm:$0xff] %vm504, 0.0
      %549 = vst.msk [vmem:[#allocation2 + $0x158] sm:$0xff] %vm504, 0.0
      %550 = vst.msk [vmem:[#allocation2 + $0x160] sm:$0x3] %vm507, 0.0
      %551 = vst.msk [vmem:[#allocation2 + $0x168] sm:$0xff] %vm504, 0.0
      %552 = vst.msk [vmem:[#allocation2 + $0x170] sm:$0xff] %vm504, 0.0
      %553 = vst.msk [vmem:[#allocation2 + $0x178] sm:$0x3] %vm507, 0.0
      %554 = vst.msk [vmem:[#allocation2 + $0x180] sm:$0xff] %vm504, 0.0
      %555 = vst.msk [vmem:[#allocation2 + $0x188] sm:$0xff] %vm504, 0.0
      %556 = vst.msk [vmem:[#allocation2 + $0x190] sm:$0x3] %vm507, 0.0
      %557 = vst.msk [vmem:[#allocation2 + $0x198] sm:$0xff] %vm504, 0.0
      %558 = vst.msk [vmem:[#allocation2 + $0x1a0] sm:$0xff] %vm504, 0.0
      %559 = vst.msk [vmem:[#allocation2 + $0x1a8] sm:$0x3] %vm507, 0.0
      %s560 = scalar_lea.vmem [#allocation2], 24
      %561 = vst.msk [vmem:[%s560 + $0x1] sm:$0xff] %vm504, %v472
      %562 = vst.msk [vmem:[%s560 + $0x9] sm:$0xff] %vm504, %v473
      %563 = vst.msk [vmem:[%s560 + $0x19] sm:$0xff] %vm504, %v474
      %564 = vst.msk [vmem:[%s560 + $0x21] sm:$0xff] %vm504, %v475
      %565 = vst.msk [vmem:[%s560 + $0x31] sm:$0xff] %vm504, %v476
      %566 = vst.msk [vmem:[%s560 + $0x39] sm:$0xff] %vm504, %v477
      %567 = vst.msk [vmem:[%s560 + $0x49] sm:$0xff] %vm504, %v478
      %568 = vst.msk [vmem:[%s560 + $0x51] sm:$0xff] %vm504, %v479
      %569 = vst.msk [vmem:[%s560 + $0x61] sm:$0xff] %vm504, %v480
      %570 = vst.msk [vmem:[%s560 + $0x69] sm:$0xff] %vm504, %v481
      %571 = vst.msk [vmem:[%s560 + $0x79] sm:$0xff] %vm504, %v482
      %572 = vst.msk [vmem:[%s560 + $0x81] sm:$0xff] %vm504, %v483
      %573 = vst.msk [vmem:[%s560 + $0x91] sm:$0xff] %vm504, %v484
      %574 = vst.msk [vmem:[%s560 + $0x99] sm:$0xff] %vm504, %v485
      %575 = vst.msk [vmem:[%s560 + $0xa9] sm:$0xff] %vm504, %v486
      %576 = vst.msk [vmem:[%s560 + $0xb1] sm:$0xff] %vm504, %v487
      %577 = vst.msk [vmem:[%s560 + $0xc1] sm:$0xff] %vm504, %v488
      %578 = vst.msk [vmem:[%s560 + $0xc9] sm:$0xff] %vm504, %v489
      %579 = vst.msk [vmem:[%s560 + $0xd9] sm:$0xff] %vm504, %v490
      %580 = vst.msk [vmem:[%s560 + $0xe1] sm:$0xff] %vm504, %v491
      %581 = vst.msk [vmem:[%s560 + $0xf1] sm:$0xff] %vm504, %v492
      %582 = vst.msk [vmem:[%s560 + $0xf9] sm:$0xff] %vm504, %v493
      %583 = vst.msk [vmem:[%s560 + $0x109] sm:$0xff] %vm504, %v494
      %584 = vst.msk [vmem:[%s560 + $0x111] sm:$0xff] %vm504, %v495
      %585 = vst.msk [vmem:[%s560 + $0x121] sm:$0xff] %vm504, %v496
      %586 = vst.msk [vmem:[%s560 + $0x129] sm:$0xff] %vm504, %v497
      %587 = vst.msk [vmem:[%s560 + $0x139] sm:$0xff] %vm504, %v498
      %588 = vst.msk [vmem:[%s560 + $0x141] sm:$0xff] %vm504, %v499
      %589 = vst.msk [vmem:[%s560 + $0x151] sm:$0xff] %vm504, %v500
      %590 = vst.msk [vmem:[%s560 + $0x159] sm:$0xff] %vm504, %v501
      %591 = vst.msk [vmem:[%s560 + $0x169] sm:$0xff] %vm504, %v502
      %592 = vst.msk [vmem:[%s560 + $0x171] sm:$0xff] %vm504, %v503
      %p593 = scmp.gt.s32.totalorder %s22, 0
      // Predicated region
      $region41: #{tpu_custom_call.1} parent=39 // pred_check
        %p594 = pneg %p593
      $region42: #{tpu_custom_call.1} parent=39 // pred_check_branch
        %596 = sbr.rel (%p594) target = $region44
      $region43: #{tpu_custom_call.1} parent=39 // pred_region
        %v597 = vld [vmem:[%s426] sm:$0xff]
        %v598 = vld [vmem:[%s426 + $0x8] sm:$0xff]
        %599 = vst.msk [vmem:[#allocation2 + $0x1] sm:$0xff] %vm504, %v597
        %600 = vst.msk [vmem:[#allocation2 + $0x9] sm:$0xff] %vm504, %v598
      $region44: #{tpu_custom_call.1} parent=39 // pred_fallthru
        _
      %p601 = scmp.lt.s32.totalorder %s22, 0
      // Predicated region
      $region45: #{tpu_custom_call.1} parent=39 // pred_check
        %p602 = pneg %p601
      $region46: #{tpu_custom_call.1} parent=39 // pred_check_branch
        %604 = sbr.rel (%p602) target = $region48
      $region47: #{tpu_custom_call.1} parent=39 // pred_region
        %v605 = vld [vmem:[%s446] sm:$0xff]
        %v606 = vld [vmem:[%s446 + $0x8] sm:$0xff]
        %s607 = scalar_lea.vmem [#allocation2], 408
        %608 = vst.msk [vmem:[%s607 + $0x1] sm:$0xff] %vm504, %v605
        %609 = vst.msk [vmem:[%s607 + $0x9] sm:$0xff] %vm504, %v606
      $region48: #{tpu_custom_call.1} parent=39 // pred_fallthru
        _
      %v610 = vld [vmem:[#allocation2] sm:$0xff]
      %v611 = vld [vmem:[#allocation2 + $0x8] sm:$0xff]
      %v612 = vld [vmem:[#allocation2 + $0x10] sm:$0x3]
      %v613 = vld [vmem:[#allocation2 + $0x18] sm:$0xff]
      %v614 = vld [vmem:[#allocation2 + $0x20] sm:$0xff]
      %v615 = vld [vmem:[#allocation2 + $0x28] sm:$0x3]
      %v616 = vld [vmem:[#allocation2 + $0x30] sm:$0xff]
      %v617 = vld [vmem:[#allocation2 + $0x38] sm:$0xff]
      %v618 = vld [vmem:[#allocation2 + $0x40] sm:$0x3]
      %v619 = vld [vmem:[#allocation2 + $0x48] sm:$0xff]
      %v620 = vld [vmem:[#allocation2 + $0x50] sm:$0xff]
      %v621 = vld [vmem:[#allocation2 + $0x58] sm:$0x3]
      %v622 = vld [vmem:[#allocation2 + $0x60] sm:$0xff]
      %v623 = vld [vmem:[#allocation2 + $0x68] sm:$0xff]
      %v624 = vld [vmem:[#allocation2 + $0x70] sm:$0x3]
      %v625 = vld [vmem:[#allocation2 + $0x78] sm:$0xff]
      %v626 = vld [vmem:[#allocation2 + $0x80] sm:$0xff]
      %v627 = vld [vmem:[#allocation2 + $0x88] sm:$0x3]
      %v628 = vld [vmem:[#allocation2 + $0x90] sm:$0xff]
      %v629 = vld [vmem:[#allocation2 + $0x98] sm:$0xff]
      %v630 = vld [vmem:[#allocation2 + $0xa0] sm:$0x3]
      %v631 = vld [vmem:[#allocation2 + $0xa8] sm:$0xff]
      %v632 = vld [vmem:[#allocation2 + $0xb0] sm:$0xff]
      %v633 = vld [vmem:[#allocation2 + $0xb8] sm:$0x3]
      %v634 = vld [vmem:[#allocation2 + $0xc0] sm:$0xff]
      %v635 = vld [vmem:[#allocation2 + $0xc8] sm:$0xff]
      %v636 = vld [vmem:[#allocation2 + $0xd0] sm:$0x3]
      %v637 = vld [vmem:[#allocation2 + $0xd8] sm:$0xff]
      %v638 = vld [vmem:[#allocation2 + $0xe0] sm:$0xff]
      %v639 = vld [vmem:[#allocation2 + $0xe8] sm:$0x3]
      %v640 = vld [vmem:[#allocation2 + $0xf0] sm:$0xff]
      %v641 = vld [vmem:[#allocation2 + $0xf8] sm:$0xff]
      %v642 = vld [vmem:[#allocation2 + $0x100] sm:$0x3]
      %v643 = vld [vmem:[#allocation2 + $0x108] sm:$0xff]
      %v644 = vld [vmem:[#allocation2 + $0x110] sm:$0xff]
      %v645 = vld [vmem:[#allocation2 + $0x118] sm:$0x3]
      %v646 = vld [vmem:[#allocation2 + $0x120] sm:$0xff]
      %v647 = vld [vmem:[#allocation2 + $0x128] sm:$0xff]
      %v648 = vld [vmem:[#allocation2 + $0x130] sm:$0x3]
      %v649 = vld [vmem:[#allocation2 + $0x138] sm:$0xff]
      %v650 = vld [vmem:[#allocation2 + $0x140] sm:$0xff]
      %v651 = vld [vmem:[#allocation2 + $0x148] sm:$0x3]
      %v652 = vld [vmem:[#allocation2 + $0x150] sm:$0xff]
      %v653 = vld [vmem:[#allocation2 + $0x158] sm:$0xff]
      %v654 = vld [vmem:[#allocation2 + $0x160] sm:$0x3]
      %v655 = vld [vmem:[#allocation2 + $0x168] sm:$0xff]
      %v656 = vld [vmem:[#allocation2 + $0x170] sm:$0xff]
      %v657 = vld [vmem:[#allocation2 + $0x178] sm:$0x3]
      %v658 = vld [vmem:[#allocation2 + $0x180] sm:$0xff]
      %v659 = vld [vmem:[#allocation2 + $0x188] sm:$0xff]
      %v660 = vld [vmem:[#allocation2 + $0x190] sm:$0x3]
      %v661 = vld [vmem:[#allocation2 + $0x198] sm:$0xff]
      %v662 = vld [vmem:[#allocation2 + $0x1a0] sm:$0xff]
      %v663 = vld [vmem:[#allocation2 + $0x1a8] sm:$0x3]
      %v664 = vld [vmem:[%s454] sm:$0x1]
      %v665 = vlaneseq
      %v666 = vshrl.u32 %v665, 7
      %v667 = vsub.s32 0, %v666
      %v668 = vrot.slane %v664, %v667
      %v669 = vmul.f32 %v610, %v668
      %v670 = vmul.f32 %v611, %v668
      %v671 = vmul.f32 %v613, %v668
      %v672 = vmul.f32 %v614, %v668
      %v673 = vmul.f32 %v616, %v668
      %v674 = vmul.f32 %v617, %v668
      %v675 = vmul.f32 %v619, %v668
      %v676 = vmul.f32 %v620, %v668
      %v677 = vmul.f32 %v622, %v668
      %v678 = vmul.f32 %v623, %v668
      %v679 = vmul.f32 %v625, %v668
      %v680 = vmul.f32 %v626, %v668
      %v681 = vmul.f32 %v628, %v668
      %v682 = vmul.f32 %v629, %v668
      %v683 = vmul.f32 %v631, %v668
      %v684 = vmul.f32 %v632, %v668
      %v685 = vmul.f32 %v634, %v668
      %v686 = vmul.f32 %v635, %v668
      %v687 = vmul.f32 %v637, %v668
      %v688 = vmul.f32 %v638, %v668
      %v689 = vmul.f32 %v640, %v668
      %v690 = vmul.f32 %v641, %v668
      %v691 = vmul.f32 %v643, %v668
      %v692 = vmul.f32 %v644, %v668
      %v693 = vmul.f32 %v646, %v668
      %v694 = vmul.f32 %v647, %v668
      %v695 = vmul.f32 %v649, %v668
      %v696 = vmul.f32 %v650, %v668
      %v697 = vmul.f32 %v652, %v668
      %v698 = vmul.f32 %v653, %v668
      %v699 = vmul.f32 %v655, %v668
      %v700 = vmul.f32 %v656, %v668
      %v701 = vadd.f32 %v669, 0.0
      %v702 = vadd.f32 %v670, 0.0
      %v703 = vadd.f32 %v671, 0.0
      %v704 = vadd.f32 %v672, 0.0
      %v705 = vadd.f32 %v673, 0.0
      %v706 = vadd.f32 %v674, 0.0
      %v707 = vadd.f32 %v675, 0.0
      %v708 = vadd.f32 %v676, 0.0
      %v709 = vadd.f32 %v677, 0.0
      %v710 = vadd.f32 %v678, 0.0
      %v711 = vadd.f32 %v679, 0.0
      %v712 = vadd.f32 %v680, 0.0
      %v713 = vadd.f32 %v681, 0.0
      %v714 = vadd.f32 %v682, 0.0
      %v715 = vadd.f32 %v683, 0.0
      %v716 = vadd.f32 %v684, 0.0
      %v717 = vadd.f32 %v685, 0.0
      %v718 = vadd.f32 %v686, 0.0
      %v719 = vadd.f32 %v687, 0.0
      %v720 = vadd.f32 %v688, 0.0
      %v721 = vadd.f32 %v689, 0.0
      %v722 = vadd.f32 %v690, 0.0
      %v723 = vadd.f32 %v691, 0.0
      %v724 = vadd.f32 %v692, 0.0
      %v725 = vadd.f32 %v693, 0.0
      %v726 = vadd.f32 %v694, 0.0
      %v727 = vadd.f32 %v695, 0.0
      %v728 = vadd.f32 %v696, 0.0
      %v729 = vadd.f32 %v697, 0.0
      %v730 = vadd.f32 %v698, 0.0
      %v731 = vadd.f32 %v699, 0.0
      %v732 = vadd.f32 %v700, 0.0
      %s733 = scalar_lea.vmem %s454, 4
      %v734 = vld [vmem:[%s733] sm:$0x1]
      %v735 = vlaneseq
      %v736 = vshrl.u32 %v735, 7
      %v737 = vsub.s32 0, %v736
      %v738 = vrot.slane %v734, %v737
      %v739 = vmul.f32 %v613, %v738
      %v740 = vmul.f32 %v614, %v738
      %v741 = vmul.f32 %v616, %v738
      %v742 = vmul.f32 %v617, %v738
      %v743 = vmul.f32 %v619, %v738
      %v744 = vmul.f32 %v620, %v738
      %v745 = vmul.f32 %v622, %v738
      %v746 = vmul.f32 %v623, %v738
      %v747 = vmul.f32 %v625, %v738
      %v748 = vmul.f32 %v626, %v738
      %v749 = vmul.f32 %v628, %v738
      %v750 = vmul.f32 %v629, %v738
      %v751 = vmul.f32 %v631, %v738
      %v752 = vmul.f32 %v632, %v738
      %v753 = vmul.f32 %v634, %v738
      %v754 = vmul.f32 %v635, %v738
      %v755 = vmul.f32 %v637, %v738
      %v756 = vmul.f32 %v638, %v738
      %v757 = vmul.f32 %v640, %v738
      %v758 = vmul.f32 %v641, %v738
      %v759 = vmul.f32 %v643, %v738
      %v760 = vmul.f32 %v644, %v738
      %v761 = vmul.f32 %v646, %v738
      %v762 = vmul.f32 %v647, %v738
      %v763 = vmul.f32 %v649, %v738
      %v764 = vmul.f32 %v650, %v738
      %v765 = vmul.f32 %v652, %v738
      %v766 = vmul.f32 %v653, %v738
      %v767 = vmul.f32 %v655, %v738
      %v768 = vmul.f32 %v656, %v738
      %v769 = vmul.f32 %v658, %v738
      %v770 = vmul.f32 %v659, %v738
      %v771 = vadd.f32 %v701, %v739
      %v772 = vadd.f32 %v702, %v740
      %v773 = vadd.f32 %v703, %v741
      %v774 = vadd.f32 %v704, %v742
      %v775 = vadd.f32 %v705, %v743
      %v776 = vadd.f32 %v706, %v744
      %v777 = vadd.f32 %v707, %v745
      %v778 = vadd.f32 %v708, %v746
      %v779 = vadd.f32 %v709, %v747
      %v780 = vadd.f32 %v710, %v748
      %v781 = vadd.f32 %v711, %v749
      %v782 = vadd.f32 %v712, %v750
      %v783 = vadd.f32 %v713, %v751
      %v784 = vadd.f32 %v714, %v752
      %v785 = vadd.f32 %v715, %v753
      %v786 = vadd.f32 %v716, %v754
      %v787 = vadd.f32 %v717, %v755
      %v788 = vadd.f32 %v718, %v756
      %v789 = vadd.f32 %v719, %v757
      %v790 = vadd.f32 %v720, %v758
      %v791 = vadd.f32 %v721, %v759
      %v792 = vadd.f32 %v722, %v760
      %v793 = vadd.f32 %v723, %v761
      %v794 = vadd.f32 %v724, %v762
      %v795 = vadd.f32 %v725, %v763
      %v796 = vadd.f32 %v726, %v764
      %v797 = vadd.f32 %v727, %v765
      %v798 = vadd.f32 %v728, %v766
      %v799 = vadd.f32 %v729, %v767
      %v800 = vadd.f32 %v730, %v768
      %v801 = vadd.f32 %v731, %v769
      %v802 = vadd.f32 %v732, %v770
      %s803 = scalar_lea.vmem %s454, 8
      %v804 = vld [vmem:[%s803] sm:$0x1]
      %v805 = vlaneseq
      %v806 = vshrl.u32 %v805, 7
      %v807 = vsub.s32 0, %v806
      %v808 = vrot.slane %v804, %v807
      %v809 = vmul.f32 %v616, %v808
      %v810 = vmul.f32 %v617, %v808
      %v811 = vmul.f32 %v619, %v808
      %v812 = vmul.f32 %v620, %v808
      %v813 = vmul.f32 %v622, %v808
      %v814 = vmul.f32 %v623, %v808
      %v815 = vmul.f32 %v625, %v808
      %v816 = vmul.f32 %v626, %v808
      %v817 = vmul.f32 %v628, %v808
      %v818 = vmul.f32 %v629, %v808
      %v819 = vmul.f32 %v631, %v808
      %v820 = vmul.f32 %v632, %v808
      %v821 = vmul.f32 %v634, %v808
      %v822 = vmul.f32 %v635, %v808
      %v823 = vmul.f32 %v637, %v808
      %v824 = vmul.f32 %v638, %v808
      %v825 = vmul.f32 %v640, %v808
      %v826 = vmul.f32 %v641, %v808
      %v827 = vmul.f32 %v643, %v808
      %v828 = vmul.f32 %v644, %v808
      %v829 = vmul.f32 %v646, %v808
      %v830 = vmul.f32 %v647, %v808
      %v831 = vmul.f32 %v649, %v808
      %v832 = vmul.f32 %v650, %v808
      %v833 = vmul.f32 %v652, %v808
      %v834 = vmul.f32 %v653, %v808
      %v835 = vmul.f32 %v655, %v808
      %v836 = vmul.f32 %v656, %v808
      %v837 = vmul.f32 %v658, %v808
      %v838 = vmul.f32 %v659, %v808
      %v839 = vmul.f32 %v661, %v808
      %v840 = vmul.f32 %v662, %v808
      %v841 = vadd.f32 %v771, %v809
      %v842 = vadd.f32 %v772, %v810
      %v843 = vadd.f32 %v773, %v811
      %v844 = vadd.f32 %v774, %v812
      %v845 = vadd.f32 %v775, %v813
      %v846 = vadd.f32 %v776, %v814
      %v847 = vadd.f32 %v777, %v815
      %v848 = vadd.f32 %v778, %v816
      %v849 = vadd.f32 %v779, %v817
      %v850 = vadd.f32 %v780, %v818
      %v851 = vadd.f32 %v781, %v819
      %v852 = vadd.f32 %v782, %v820
      %v853 = vadd.f32 %v783, %v821
      %v854 = vadd.f32 %v784, %v822
      %v855 = vadd.f32 %v785, %v823
      %v856 = vadd.f32 %v786, %v824
      %v857 = vadd.f32 %v787, %v825
      %v858 = vadd.f32 %v788, %v826
      %v859 = vadd.f32 %v789, %v827
      %v860 = vadd.f32 %v790, %v828
      %v861 = vadd.f32 %v791, %v829
      %v862 = vadd.f32 %v792, %v830
      %v863 = vadd.f32 %v793, %v831
      %v864 = vadd.f32 %v794, %v832
      %v865 = vadd.f32 %v795, %v833
      %v866 = vadd.f32 %v796, %v834
      %v867 = vadd.f32 %v797, %v835
      %v868 = vadd.f32 %v798, %v836
      %v869 = vadd.f32 %v799, %v837
      %v870 = vadd.f32 %v800, %v838
      %v871 = vadd.f32 %v801, %v839
      %v872 = vadd.f32 %v802, %v840
      %v873 = vld [vmem:[%s454 + $0x1] sm:$0x1]
      %v874 = vlaneseq
      %v875 = vshrl.u32 %v874, 7
      %v876 = vsub.s32 0, %v875
      %v877 = vrot.slane %v873, %v876
      %v878 = vmul.f32 %v610, %v877
      %v879 = vmul.f32 %v611, %v877
      %v880 = vmul.f32 %v612, %v877
      %v881 = vmul.f32 %v613, %v877
      %v882 = vmul.f32 %v614, %v877
      %v883 = vmul.f32 %v615, %v877
      %v884 = vmul.f32 %v616, %v877
      %v885 = vmul.f32 %v617, %v877
      %v886 = vmul.f32 %v618, %v877
      %v887 = vmul.f32 %v619, %v877
      %v888 = vmul.f32 %v620, %v877
      %v889 = vmul.f32 %v621, %v877
      %v890 = vmul.f32 %v622, %v877
      %v891 = vmul.f32 %v623, %v877
      %v892 = vmul.f32 %v624, %v877
      %v893 = vmul.f32 %v625, %v877
      %v894 = vmul.f32 %v626, %v877
      %v895 = vmul.f32 %v627, %v877
      %v896 = vmul.f32 %v628, %v877
      %v897 = vmul.f32 %v629, %v877
      %v898 = vmul.f32 %v630, %v877
      %v899 = vmul.f32 %v631, %v877
      %v900 = vmul.f32 %v632, %v877
      %v901 = vmul.f32 %v633, %v877
      %v902 = vmul.f32 %v634, %v877
      %v903 = vmul.f32 %v635, %v877
      %v904 = vmul.f32 %v636, %v877
      %v905 = vmul.f32 %v637, %v877
      %v906 = vmul.f32 %v638, %v877
      %v907 = vmul.f32 %v639, %v877
      %v908 = vmul.f32 %v640, %v877
      %v909 = vmul.f32 %v641, %v877
      %v910 = vmul.f32 %v642, %v877
      %v911 = vmul.f32 %v643, %v877
      %v912 = vmul.f32 %v644, %v877
      %v913 = vmul.f32 %v645, %v877
      %v914 = vmul.f32 %v646, %v877
      %v915 = vmul.f32 %v647, %v877
      %v916 = vmul.f32 %v648, %v877
      %v917 = vmul.f32 %v649, %v877
      %v918 = vmul.f32 %v650, %v877
      %v919 = vmul.f32 %v651, %v877
      %v920 = vmul.f32 %v652, %v877
      %v921 = vmul.f32 %v653, %v877
      %v922 = vmul.f32 %v654, %v877
      %v923 = vmul.f32 %v655, %v877
      %v924 = vmul.f32 %v656, %v877
      %v925 = vmul.f32 %v657, %v877
      %vm974 = vcmask 1046528
      %v975 = vrot.slane %v878, 1
      %v976 = vrot.slane %v879, 1
      %v977 = vsel %vm974, %v975, %v976
      %v978 = vrot.slane %v880, 1
      %v979 = vsel %vm974, %v976, %v978
      %v980 = vrot.slane %v881, 1
      %v981 = vrot.slane %v882, 1
      %v982 = vsel %vm974, %v980, %v981
      %v983 = vrot.slane %v883, 1
      %v984 = vsel %vm974, %v981, %v983
      %v985 = vrot.slane %v884, 1
      %v986 = vrot.slane %v885, 1
      %v987 = vsel %vm974, %v985, %v986
      %v988 = vrot.slane %v886, 1
      %v989 = vsel %vm974, %v986, %v988
      %v990 = vrot.slane %v887, 1
      %v991 = vrot.slane %v888, 1
      %v992 = vsel %vm974, %v990, %v991
      %v993 = vrot.slane %v889, 1
      %v994 = vsel %vm974, %v991, %v993
      %v995 = vrot.slane %v890, 1
      %v996 = vrot.slane %v891, 1
      %v997 = vsel %vm974, %v995, %v996
      %v998 = vrot.slane %v892, 1
      %v999 = vsel %vm974, %v996, %v998
      %v1000 = vrot.slane %v893, 1
      %v1001 = vrot.slane %v894, 1
      %v1002 = vsel %vm974, %v1000, %v1001
      %v1003 = vrot.slane %v895, 1
      %v1004 = vsel %vm974, %v1001, %v1003
      %v1005 = vrot.slane %v896, 1
      %v1006 = vrot.slane %v897, 1
      %v1007 = vsel %vm974, %v1005, %v1006
      %v1008 = vrot.slane %v898, 1
      %v1009 = vsel %vm974, %v1006, %v1008
      %v1010 = vrot.slane %v899, 1
      %v1011 = vrot.slane %v900, 1
      %v1012 = vsel %vm974, %v1010, %v1011
      %v1013 = vrot.slane %v901, 1
      %v1014 = vsel %vm974, %v1011, %v1013
      %v1015 = vrot.slane %v902, 1
      %v1016 = vrot.slane %v903, 1
      %v1017 = vsel %vm974, %v1015, %v1016
      %v1018 = vrot.slane %v904, 1
      %v1019 = vsel %vm974, %v1016, %v1018
      %v1020 = vrot.slane %v905, 1
      %v1021 = vrot.slane %v906, 1
      %v1022 = vsel %vm974, %v1020, %v1021
      %v1023 = vrot.slane %v907, 1
      %v1024 = vsel %vm974, %v1021, %v1023
      %v1025 = vrot.slane %v908, 1
      %v1026 = vrot.slane %v909, 1
      %v1027 = vsel %vm974, %v1025, %v1026
      %v1028 = vrot.slane %v910, 1
      %v1029 = vsel %vm974, %v1026, %v1028
      %v1030 = vrot.slane %v911, 1
      %v1031 = vrot.slane %v912, 1
      %v1032 = vsel %vm974, %v1030, %v1031
      %v1033 = vrot.slane %v913, 1
      %v1034 = vsel %vm974, %v1031, %v1033
      %v1035 = vrot.slane %v914, 1
      %v1036 = vrot.slane %v915, 1
      %v1037 = vsel %vm974, %v1035, %v1036
      %v1038 = vrot.slane %v916, 1
      %v1039 = vsel %vm974, %v1036, %v1038
      %v1040 = vrot.slane %v917, 1
      %v1041 = vrot.slane %v918, 1
      %v1042 = vsel %vm974, %v1040, %v1041
      %v1043 = vrot.slane %v919, 1
      %v1044 = vsel %vm974, %v1041, %v1043
      %v1045 = vrot.slane %v920, 1
      %v1046 = vrot.slane %v921, 1
      %v1047 = vsel %vm974, %v1045, %v1046
      %v1048 = vrot.slane %v922, 1
      %v1049 = vsel %vm974, %v1046, %v1048
      %v1050 = vrot.slane %v923, 1
      %v1051 = vrot.slane %v924, 1
      %v1052 = vsel %vm974, %v1050, %v1051
      %v1053 = vrot.slane %v925, 1
      %v1054 = vsel %vm974, %v1051, %v1053
      %v1087 = vadd.f32 %v841, %v977
      %v1088 = vadd.f32 %v842, %v979
      %v1089 = vadd.f32 %v843, %v982
      %v1090 = vadd.f32 %v844, %v984
      %v1091 = vadd.f32 %v845, %v987
      %v1092 = vadd.f32 %v846, %v989
      %v1093 = vadd.f32 %v847, %v992
      %v1094 = vadd.f32 %v848, %v994
      %v1095 = vadd.f32 %v849, %v997
      %v1096 = vadd.f32 %v850, %v999
      %v1097 = vadd.f32 %v851, %v1002
      %v1098 = vadd.f32 %v852, %v1004
      %v1099 = vadd.f32 %v853, %v1007
      %v1100 = vadd.f32 %v854, %v1009
      %v1101 = vadd.f32 %v855, %v1012
      %v1102 = vadd.f32 %v856, %v1014
      %v1103 = vadd.f32 %v857, %v1017
      %v1104 = vadd.f32 %v858, %v1019
      %v1105 = vadd.f32 %v859, %v1022
      %v1106 = vadd.f32 %v860, %v1024
      %v1107 = vadd.f32 %v861, %v1027
      %v1108 = vadd.f32 %v862, %v1029
      %v1109 = vadd.f32 %v863, %v1032
      %v1110 = vadd.f32 %v864, %v1034
      %v1111 = vadd.f32 %v865, %v1037
      %v1112 = vadd.f32 %v866, %v1039
      %v1113 = vadd.f32 %v867, %v1042
      %v1114 = vadd.f32 %v868, %v1044
      %v1115 = vadd.f32 %v869, %v1047
      %v1116 = vadd.f32 %v870, %v1049
      %v1117 = vadd.f32 %v871, %v1052
      %v1118 = vadd.f32 %v872, %v1054
      %v1119 = vld [vmem:[%s733 + $0x1] sm:$0x1]
      %v1120 = vlaneseq
      %v1121 = vshrl.u32 %v1120, 7
      %v1122 = vsub.s32 0, %v1121
      %v1123 = vrot.slane %v1119, %v1122
      %v1124 = vmul.f32 %v613, %v1123
      %v1125 = vmul.f32 %v614, %v1123
      %v1126 = vmul.f32 %v615, %v1123
      %v1127 = vmul.f32 %v616, %v1123
      %v1128 = vmul.f32 %v617, %v1123
      %v1129 = vmul.f32 %v618, %v1123
      %v1130 = vmul.f32 %v619, %v1123
      %v1131 = vmul.f32 %v620, %v1123
      %v1132 = vmul.f32 %v621, %v1123
      %v1133 = vmul.f32 %v622, %v1123
      %v1134 = vmul.f32 %v623, %v1123
      %v1135 = vmul.f32 %v624, %v1123
      %v1136 = vmul.f32 %v625, %v1123
      %v1137 = vmul.f32 %v626, %v1123
      %v1138 = vmul.f32 %v627, %v1123
      %v1139 = vmul.f32 %v628, %v1123
      %v1140 = vmul.f32 %v629, %v1123
      %v1141 = vmul.f32 %v630, %v1123
      %v1142 = vmul.f32 %v631, %v1123
      %v1143 = vmul.f32 %v632, %v1123
      %v1144 = vmul.f32 %v633, %v1123
      %v1145 = vmul.f32 %v634, %v1123
      %v1146 = vmul.f32 %v635, %v1123
      %v1147 = vmul.f32 %v636, %v1123
      %v1148 = vmul.f32 %v637, %v1123
      %v1149 = vmul.f32 %v638, %v1123
      %v1150 = vmul.f32 %v639, %v1123
      %v1151 = vmul.f32 %v640, %v1123
      %v1152 = vmul.f32 %v641, %v1123
      %v1153 = vmul.f32 %v642, %v1123
      %v1154 = vmul.f32 %v643, %v1123
      %v1155 = vmul.f32 %v644, %v1123
      %v1156 = vmul.f32 %v645, %v1123
      %v1157 = vmul.f32 %v646, %v1123
      %v1158 = vmul.f32 %v647, %v1123
      %v1159 = vmul.f32 %v648, %v1123
      %v1160 = vmul.f32 %v649, %v1123
      %v1161 = vmul.f32 %v650, %v1123
      %v1162 = vmul.f32 %v651, %v1123
      %v1163 = vmul.f32 %v652, %v1123
      %v1164 = vmul.f32 %v653, %v1123
      %v1165 = vmul.f32 %v654, %v1123
      %v1166 = vmul.f32 %v655, %v1123
      %v1167 = vmul.f32 %v656, %v1123
      %v1168 = vmul.f32 %v657, %v1123
      %v1169 = vmul.f32 %v658, %v1123
      %v1170 = vmul.f32 %v659, %v1123
      %v1171 = vmul.f32 %v660, %v1123
      %v1220 = vrot.slane %v1124, 1
      %v1221 = vrot.slane %v1125, 1
      %v1222 = vsel %vm974, %v1220, %v1221
      %v1223 = vrot.slane %v1126, 1
      %v1224 = vsel %vm974, %v1221, %v1223
      %v1225 = vrot.slane %v1127, 1
      %v1226 = vrot.slane %v1128, 1
      %v1227 = vsel %vm974, %v1225, %v1226
      %v1228 = vrot.slane %v1129, 1
      %v1229 = vsel %vm974, %v1226, %v1228
      %v1230 = vrot.slane %v1130, 1
      %v1231 = vrot.slane %v1131, 1
      %v1232 = vsel %vm974, %v1230, %v1231
      %v1233 = vrot.slane %v1132, 1
      %v1234 = vsel %vm974, %v1231, %v1233
      %v1235 = vrot.slane %v1133, 1
      %v1236 = vrot.slane %v1134, 1
      %v1237 = vsel %vm974, %v1235, %v1236
      %v1238 = vrot.slane %v1135, 1
      %v1239 = vsel %vm974, %v1236, %v1238
      %v1240 = vrot.slane %v1136, 1
      %v1241 = vrot.slane %v1137, 1
      %v1242 = vsel %vm974, %v1240, %v1241
      %v1243 = vrot.slane %v1138, 1
      %v1244 = vsel %vm974, %v1241, %v1243
      %v1245 = vrot.slane %v1139, 1
      %v1246 = vrot.slane %v1140, 1
      %v1247 = vsel %vm974, %v1245, %v1246
      %v1248 = vrot.slane %v1141, 1
      %v1249 = vsel %vm974, %v1246, %v1248
      %v1250 = vrot.slane %v1142, 1
      %v1251 = vrot.slane %v1143, 1
      %v1252 = vsel %vm974, %v1250, %v1251
      %v1253 = vrot.slane %v1144, 1
      %v1254 = vsel %vm974, %v1251, %v1253
      %v1255 = vrot.slane %v1145, 1
      %v1256 = vrot.slane %v1146, 1
      %v1257 = vsel %vm974, %v1255, %v1256
      %v1258 = vrot.slane %v1147, 1
      %v1259 = vsel %vm974, %v1256, %v1258
      %v1260 = vrot.slane %v1148, 1
      %v1261 = vrot.slane %v1149, 1
      %v1262 = vsel %vm974, %v1260, %v1261
      %v1263 = vrot.slane %v1150, 1
      %v1264 = vsel %vm974, %v1261, %v1263
      %v1265 = vrot.slane %v1151, 1
      %v1266 = vrot.slane %v1152, 1
      %v1267 = vsel %vm974, %v1265, %v1266
      %v1268 = vrot.slane %v1153, 1
      %v1269 = vsel %vm974, %v1266, %v1268
      %v1270 = vrot.slane %v1154, 1
      %v1271 = vrot.slane %v1155, 1
      %v1272 = vsel %vm974, %v1270, %v1271
      %v1273 = vrot.slane %v1156, 1
      %v1274 = vsel %vm974, %v1271, %v1273
      %v1275 = vrot.slane %v1157, 1
      %v1276 = vrot.slane %v1158, 1
      %v1277 = vsel %vm974, %v1275, %v1276
      %v1278 = vrot.slane %v1159, 1
      %v1279 = vsel %vm974, %v1276, %v1278
      %v1280 = vrot.slane %v1160, 1
      %v1281 = vrot.slane %v1161, 1
      %v1282 = vsel %vm974, %v1280, %v1281
      %v1283 = vrot.slane %v1162, 1
      %v1284 = vsel %vm974, %v1281, %v1283
      %v1285 = vrot.slane %v1163, 1
      %v1286 = vrot.slane %v1164, 1
      %v1287 = vsel %vm974, %v1285, %v1286
      %v1288 = vrot.slane %v1165, 1
      %v1289 = vsel %vm974, %v1286, %v1288
      %v1290 = vrot.slane %v1166, 1
      %v1291 = vrot.slane %v1167, 1
      %v1292 = vsel %vm974, %v1290, %v1291
      %v1293 = vrot.slane %v1168, 1
      %v1294 = vsel %vm974, %v1291, %v1293
      %v1295 = vrot.slane %v1169, 1
      %v1296 = vrot.slane %v1170, 1
      %v1297 = vsel %vm974, %v1295, %v1296
      %v1298 = vrot.slane %v1171, 1
      %v1299 = vsel %vm974, %v1296, %v1298
      %v1332 = vadd.f32 %v1087, %v1222
      %v1333 = vadd.f32 %v1088, %v1224
      %v1334 = vadd.f32 %v1089, %v1227
      %v1335 = vadd.f32 %v1090, %v1229
      %v1336 = vadd.f32 %v1091, %v1232
      %v1337 = vadd.f32 %v1092, %v1234
      %v1338 = vadd.f32 %v1093, %v1237
      %v1339 = vadd.f32 %v1094, %v1239
      %v1340 = vadd.f32 %v1095, %v1242
      %v1341 = vadd.f32 %v1096, %v1244
      %v1342 = vadd.f32 %v1097, %v1247
      %v1343 = vadd.f32 %v1098, %v1249
      %v1344 = vadd.f32 %v1099, %v1252
      %v1345 = vadd.f32 %v1100, %v1254
      %v1346 = vadd.f32 %v1101, %v1257
      %v1347 = vadd.f32 %v1102, %v1259
      %v1348 = vadd.f32 %v1103, %v1262
      %v1349 = vadd.f32 %v1104, %v1264
      %v1350 = vadd.f32 %v1105, %v1267
      %v1351 = vadd.f32 %v1106, %v1269
      %v1352 = vadd.f32 %v1107, %v1272
      %v1353 = vadd.f32 %v1108, %v1274
      %v1354 = vadd.f32 %v1109, %v1277
      %v1355 = vadd.f32 %v1110, %v1279
      %v1356 = vadd.f32 %v1111, %v1282
      %v1357 = vadd.f32 %v1112, %v1284
      %v1358 = vadd.f32 %v1113, %v1287
      %v1359 = vadd.f32 %v1114, %v1289
      %v1360 = vadd.f32 %v1115, %v1292
      %v1361 = vadd.f32 %v1116, %v1294
      %v1362 = vadd.f32 %v1117, %v1297
      %v1363 = vadd.f32 %v1118, %v1299
      %v1364 = vld [vmem:[%s803 + $0x1] sm:$0x1]
      %v1365 = vlaneseq
      %v1366 = vshrl.u32 %v1365, 7
      %v1367 = vsub.s32 0, %v1366
      %v1368 = vrot.slane %v1364, %v1367
      %v1369 = vmul.f32 %v616, %v1368
      %v1370 = vmul.f32 %v617, %v1368
      %v1371 = vmul.f32 %v618, %v1368
      %v1372 = vmul.f32 %v619, %v1368
      %v1373 = vmul.f32 %v620, %v1368
      %v1374 = vmul.f32 %v621, %v1368
      %v1375 = vmul.f32 %v622, %v1368
      %v1376 = vmul.f32 %v623, %v1368
      %v1377 = vmul.f32 %v624, %v1368
      %v1378 = vmul.f32 %v625, %v1368
      %v1379 = vmul.f32 %v626, %v1368
      %v1380 = vmul.f32 %v627, %v1368
      %v1381 = vmul.f32 %v628, %v1368
      %v1382 = vmul.f32 %v629, %v1368
      %v1383 = vmul.f32 %v630, %v1368
      %v1384 = vmul.f32 %v631, %v1368
      %v1385 = vmul.f32 %v632, %v1368
      %v1386 = vmul.f32 %v633, %v1368
      %v1387 = vmul.f32 %v634, %v1368
      %v1388 = vmul.f32 %v635, %v1368
      %v1389 = vmul.f32 %v636, %v1368
      %v1390 = vmul.f32 %v637, %v1368
      %v1391 = vmul.f32 %v638, %v1368
      %v1392 = vmul.f32 %v639, %v1368
      %v1393 = vmul.f32 %v640, %v1368
      %v1394 = vmul.f32 %v641, %v1368
      %v1395 = vmul.f32 %v642, %v1368
      %v1396 = vmul.f32 %v643, %v1368
      %v1397 = vmul.f32 %v644, %v1368
      %v1398 = vmul.f32 %v645, %v1368
      %v1399 = vmul.f32 %v646, %v1368
      %v1400 = vmul.f32 %v647, %v1368
      %v1401 = vmul.f32 %v648, %v1368
      %v1402 = vmul.f32 %v649, %v1368
      %v1403 = vmul.f32 %v650, %v1368
      %v1404 = vmul.f32 %v651, %v1368
      %v1405 = vmul.f32 %v652, %v1368
      %v1406 = vmul.f32 %v653, %v1368
      %v1407 = vmul.f32 %v654, %v1368
      %v1408 = vmul.f32 %v655, %v1368
      %v1409 = vmul.f32 %v656, %v1368
      %v1410 = vmul.f32 %v657, %v1368
      %v1411 = vmul.f32 %v658, %v1368
      %v1412 = vmul.f32 %v659, %v1368
      %v1413 = vmul.f32 %v660, %v1368
      %v1414 = vmul.f32 %v661, %v1368
      %v1415 = vmul.f32 %v662, %v1368
      %v1416 = vmul.f32 %v663, %v1368
      %v1465 = vrot.slane %v1369, 1
      %v1466 = vrot.slane %v1370, 1
      %v1467 = vsel %vm974, %v1465, %v1466
      %v1468 = vrot.slane %v1371, 1
      %v1469 = vsel %vm974, %v1466, %v1468
      %v1470 = vrot.slane %v1372, 1
      %v1471 = vrot.slane %v1373, 1
      %v1472 = vsel %vm974, %v1470, %v1471
      %v1473 = vrot.slane %v1374, 1
      %v1474 = vsel %vm974, %v1471, %v1473
      %v1475 = vrot.slane %v1375, 1
      %v1476 = vrot.slane %v1376, 1
      %v1477 = vsel %vm974, %v1475, %v1476
      %v1478 = vrot.slane %v1377, 1
      %v1479 = vsel %vm974, %v1476, %v1478
      %v1480 = vrot.slane %v1378, 1
      %v1481 = vrot.slane %v1379, 1
      %v1482 = vsel %vm974, %v1480, %v1481
      %v1483 = vrot.slane %v1380, 1
      %v1484 = vsel %vm974, %v1481, %v1483
      %v1485 = vrot.slane %v1381, 1
      %v1486 = vrot.slane %v1382, 1
      %v1487 = vsel %vm974, %v1485, %v1486
      %v1488 = vrot.slane %v1383, 1
      %v1489 = vsel %vm974, %v1486, %v1488
      %v1490 = vrot.slane %v1384, 1
      %v1491 = vrot.slane %v1385, 1
      %v1492 = vsel %vm974, %v1490, %v1491
      %v1493 = vrot.slane %v1386, 1
      %v1494 = vsel %vm974, %v1491, %v1493
      %v1495 = vrot.slane %v1387, 1
      %v1496 = vrot.slane %v1388, 1
      %v1497 = vsel %vm974, %v1495, %v1496
      %v1498 = vrot.slane %v1389, 1
      %v1499 = vsel %vm974, %v1496, %v1498
      %v1500 = vrot.slane %v1390, 1
      %v1501 = vrot.slane %v1391, 1
      %v1502 = vsel %vm974, %v1500, %v1501
      %v1503 = vrot.slane %v1392, 1
      %v1504 = vsel %vm974, %v1501, %v1503
      %v1505 = vrot.slane %v1393, 1
      %v1506 = vrot.slane %v1394, 1
      %v1507 = vsel %vm974, %v1505, %v1506
      %v1508 = vrot.slane %v1395, 1
      %v1509 = vsel %vm974, %v1506, %v1508
      %v1510 = vrot.slane %v1396, 1
      %v1511 = vrot.slane %v1397, 1
      %v1512 = vsel %vm974, %v1510, %v1511
      %v1513 = vrot.slane %v1398, 1
      %v1514 = vsel %vm974, %v1511, %v1513
      %v1515 = vrot.slane %v1399, 1
      %v1516 = vrot.slane %v1400, 1
      %v1517 = vsel %vm974, %v1515, %v1516
      %v1518 = vrot.slane %v1401, 1
      %v1519 = vsel %vm974, %v1516, %v1518
      %v1520 = vrot.slane %v1402, 1
      %v1521 = vrot.slane %v1403, 1
      %v1522 = vsel %vm974, %v1520, %v1521
      %v1523 = vrot.slane %v1404, 1
      %v1524 = vsel %vm974, %v1521, %v1523
      %v1525 = vrot.slane %v1405, 1
      %v1526 = vrot.slane %v1406, 1
      %v1527 = vsel %vm974, %v1525, %v1526
      %v1528 = vrot.slane %v1407, 1
      %v1529 = vsel %vm974, %v1526, %v1528
      %v1530 = vrot.slane %v1408, 1
      %v1531 = vrot.slane %v1409, 1
      %v1532 = vsel %vm974, %v1530, %v1531
      %v1533 = vrot.slane %v1410, 1
      %v1534 = vsel %vm974, %v1531, %v1533
      %v1535 = vrot.slane %v1411, 1
      %v1536 = vrot.slane %v1412, 1
      %v1537 = vsel %vm974, %v1535, %v1536
      %v1538 = vrot.slane %v1413, 1
      %v1539 = vsel %vm974, %v1536, %v1538
      %v1540 = vrot.slane %v1414, 1
      %v1541 = vrot.slane %v1415, 1
      %v1542 = vsel %vm974, %v1540, %v1541
      %v1543 = vrot.slane %v1416, 1
      %v1544 = vsel %vm974, %v1541, %v1543
      %v1577 = vadd.f32 %v1332, %v1467
      %v1578 = vadd.f32 %v1333, %v1469
      %v1579 = vadd.f32 %v1334, %v1472
      %v1580 = vadd.f32 %v1335, %v1474
      %v1581 = vadd.f32 %v1336, %v1477
      %v1582 = vadd.f32 %v1337, %v1479
      %v1583 = vadd.f32 %v1338, %v1482
      %v1584 = vadd.f32 %v1339, %v1484
      %v1585 = vadd.f32 %v1340, %v1487
      %v1586 = vadd.f32 %v1341, %v1489
      %v1587 = vadd.f32 %v1342, %v1492
      %v1588 = vadd.f32 %v1343, %v1494
      %v1589 = vadd.f32 %v1344, %v1497
      %v1590 = vadd.f32 %v1345, %v1499
      %v1591 = vadd.f32 %v1346, %v1502
      %v1592 = vadd.f32 %v1347, %v1504
      %v1593 = vadd.f32 %v1348, %v1507
      %v1594 = vadd.f32 %v1349, %v1509
      %v1595 = vadd.f32 %v1350, %v1512
      %v1596 = vadd.f32 %v1351, %v1514
      %v1597 = vadd.f32 %v1352, %v1517
      %v1598 = vadd.f32 %v1353, %v1519
      %v1599 = vadd.f32 %v1354, %v1522
      %v1600 = vadd.f32 %v1355, %v1524
      %v1601 = vadd.f32 %v1356, %v1527
      %v1602 = vadd.f32 %v1357, %v1529
      %v1603 = vadd.f32 %v1358, %v1532
      %v1604 = vadd.f32 %v1359, %v1534
      %v1605 = vadd.f32 %v1360, %v1537
      %v1606 = vadd.f32 %v1361, %v1539
      %v1607 = vadd.f32 %v1362, %v1542
      %v1608 = vadd.f32 %v1363, %v1544
      %v1609 = vld [vmem:[%s454 + $0x2] sm:$0x1]
      %v1610 = vlaneseq
      %v1611 = vshrl.u32 %v1610, 7
      %v1612 = vsub.s32 0, %v1611
      %v1613 = vrot.slane %v1609, %v1612
      %v1614 = vmul.f32 %v610, %v1613
      %v1615 = vmul.f32 %v611, %v1613
      %v1616 = vmul.f32 %v612, %v1613
      %v1617 = vmul.f32 %v613, %v1613
      %v1618 = vmul.f32 %v614, %v1613
      %v1619 = vmul.f32 %v615, %v1613
      %v1620 = vmul.f32 %v616, %v1613
      %v1621 = vmul.f32 %v617, %v1613
      %v1622 = vmul.f32 %v618, %v1613
      %v1623 = vmul.f32 %v619, %v1613
      %v1624 = vmul.f32 %v620, %v1613
      %v1625 = vmul.f32 %v621, %v1613
      %v1626 = vmul.f32 %v622, %v1613
      %v1627 = vmul.f32 %v623, %v1613
      %v1628 = vmul.f32 %v624, %v1613
      %v1629 = vmul.f32 %v625, %v1613
      %v1630 = vmul.f32 %v626, %v1613
      %v1631 = vmul.f32 %v627, %v1613
      %v1632 = vmul.f32 %v628, %v1613
      %v1633 = vmul.f32 %v629, %v1613
      %v1634 = vmul.f32 %v630, %v1613
      %v1635 = vmul.f32 %v631, %v1613
      %v1636 = vmul.f32 %v632, %v1613
      %v1637 = vmul.f32 %v633, %v1613
      %v1638 = vmul.f32 %v634, %v1613
      %v1639 = vmul.f32 %v635, %v1613
      %v1640 = vmul.f32 %v636, %v1613
      %v1641 = vmul.f32 %v637, %v1613
      %v1642 = vmul.f32 %v638, %v1613
      %v1643 = vmul.f32 %v639, %v1613
      %v1644 = vmul.f32 %v640, %v1613
      %v1645 = vmul.f32 %v641, %v1613
      %v1646 = vmul.f32 %v642, %v1613
      %v1647 = vmul.f32 %v643, %v1613
      %v1648 = vmul.f32 %v644, %v1613
      %v1649 = vmul.f32 %v645, %v1613
      %v1650 = vmul.f32 %v646, %v1613
      %v1651 = vmul.f32 %v647, %v1613
      %v1652 = vmul.f32 %v648, %v1613
      %v1653 = vmul.f32 %v649, %v1613
      %v1654 = vmul.f32 %v650, %v1613
      %v1655 = vmul.f32 %v651, %v1613
      %v1656 = vmul.f32 %v652, %v1613
      %v1657 = vmul.f32 %v653, %v1613
      %v1658 = vmul.f32 %v654, %v1613
      %v1659 = vmul.f32 %v655, %v1613
      %v1660 = vmul.f32 %v656, %v1613
      %v1661 = vmul.f32 %v657, %v1613
      %vm1710 = vcmask 1045504
      %v1711 = vrot.slane %v1614, 2
      %v1712 = vrot.slane %v1615, 2
      %v1713 = vsel %vm1710, %v1711, %v1712
      %v1714 = vrot.slane %v1616, 2
      %v1715 = vsel %vm1710, %v1712, %v1714
      %v1716 = vrot.slane %v1617, 2
      %v1717 = vrot.slane %v1618, 2
      %v1718 = vsel %vm1710, %v1716, %v1717
      %v1719 = vrot.slane %v1619, 2
      %v1720 = vsel %vm1710, %v1717, %v1719
      %v1721 = vrot.slane %v1620, 2
      %v1722 = vrot.slane %v1621, 2
      %v1723 = vsel %vm1710, %v1721, %v1722
      %v1724 = vrot.slane %v1622, 2
      %v1725 = vsel %vm1710, %v1722, %v1724
      %v1726 = vrot.slane %v1623, 2
      %v1727 = vrot.slane %v1624, 2
      %v1728 = vsel %vm1710, %v1726, %v1727
      %v1729 = vrot.slane %v1625, 2
      %v1730 = vsel %vm1710, %v1727, %v1729
      %v1731 = vrot.slane %v1626, 2
      %v1732 = vrot.slane %v1627, 2
      %v1733 = vsel %vm1710, %v1731, %v1732
      %v1734 = vrot.slane %v1628, 2
      %v1735 = vsel %vm1710, %v1732, %v1734
      %v1736 = vrot.slane %v1629, 2
      %v1737 = vrot.slane %v1630, 2
      %v1738 = vsel %vm1710, %v1736, %v1737
      %v1739 = vrot.slane %v1631, 2
      %v1740 = vsel %vm1710, %v1737, %v1739
      %v1741 = vrot.slane %v1632, 2
      %v1742 = vrot.slane %v1633, 2
      %v1743 = vsel %vm1710, %v1741, %v1742
      %v1744 = vrot.slane %v1634, 2
      %v1745 = vsel %vm1710, %v1742, %v1744
      %v1746 = vrot.slane %v1635, 2
      %v1747 = vrot.slane %v1636, 2
      %v1748 = vsel %vm1710, %v1746, %v1747
      %v1749 = vrot.slane %v1637, 2
      %v1750 = vsel %vm1710, %v1747, %v1749
      %v1751 = vrot.slane %v1638, 2
      %v1752 = vrot.slane %v1639, 2
      %v1753 = vsel %vm1710, %v1751, %v1752
      %v1754 = vrot.slane %v1640, 2
      %v1755 = vsel %vm1710, %v1752, %v1754
      %v1756 = vrot.slane %v1641, 2
      %v1757 = vrot.slane %v1642, 2
      %v1758 = vsel %vm1710, %v1756, %v1757
      %v1759 = vrot.slane %v1643, 2
      %v1760 = vsel %vm1710, %v1757, %v1759
      %v1761 = vrot.slane %v1644, 2
      %v1762 = vrot.slane %v1645, 2
      %v1763 = vsel %vm1710, %v1761, %v1762
      %v1764 = vrot.slane %v1646, 2
      %v1765 = vsel %vm1710, %v1762, %v1764
      %v1766 = vrot.slane %v1647, 2
      %v1767 = vrot.slane %v1648, 2
      %v1768 = vsel %vm1710, %v1766, %v1767
      %v1769 = vrot.slane %v1649, 2
      %v1770 = vsel %vm1710, %v1767, %v1769
      %v1771 = vrot.slane %v1650, 2
      %v1772 = vrot.slane %v1651, 2
      %v1773 = vsel %vm1710, %v1771, %v1772
      %v1774 = vrot.slane %v1652, 2
      %v1775 = vsel %vm1710, %v1772, %v1774
      %v1776 = vrot.slane %v1653, 2
      %v1777 = vrot.slane %v1654, 2
      %v1778 = vsel %vm1710, %v1776, %v1777
      %v1779 = vrot.slane %v1655, 2
      %v1780 = vsel %vm1710, %v1777, %v1779
      %v1781 = vrot.slane %v1656, 2
      %v1782 = vrot.slane %v1657, 2
      %v1783 = vsel %vm1710, %v1781, %v1782
      %v1784 = vrot.slane %v1658, 2
      %v1785 = vsel %vm1710, %v1782, %v1784
      %v1786 = vrot.slane %v1659, 2
      %v1787 = vrot.slane %v1660, 2
      %v1788 = vsel %vm1710, %v1786, %v1787
      %v1789 = vrot.slane %v1661, 2
      %v1790 = vsel %vm1710, %v1787, %v1789
      %v1823 = vadd.f32 %v1577, %v1713
      %v1824 = vadd.f32 %v1578, %v1715
      %v1825 = vadd.f32 %v1579, %v1718
      %v1826 = vadd.f32 %v1580, %v1720
      %v1827 = vadd.f32 %v1581, %v1723
      %v1828 = vadd.f32 %v1582, %v1725
      %v1829 = vadd.f32 %v1583, %v1728
      %v1830 = vadd.f32 %v1584, %v1730
      %v1831 = vadd.f32 %v1585, %v1733
      %v1832 = vadd.f32 %v1586, %v1735
      %v1833 = vadd.f32 %v1587, %v1738
      %v1834 = vadd.f32 %v1588, %v1740
      %v1835 = vadd.f32 %v1589, %v1743
      %v1836 = vadd.f32 %v1590, %v1745
      %v1837 = vadd.f32 %v1591, %v1748
      %v1838 = vadd.f32 %v1592, %v1750
      %v1839 = vadd.f32 %v1593, %v1753
      %v1840 = vadd.f32 %v1594, %v1755
      %v1841 = vadd.f32 %v1595, %v1758
      %v1842 = vadd.f32 %v1596, %v1760
      %v1843 = vadd.f32 %v1597, %v1763
      %v1844 = vadd.f32 %v1598, %v1765
      %v1845 = vadd.f32 %v1599, %v1768
      %v1846 = vadd.f32 %v1600, %v1770
      %v1847 = vadd.f32 %v1601, %v1773
      %v1848 = vadd.f32 %v1602, %v1775
      %v1849 = vadd.f32 %v1603, %v1778
      %v1850 = vadd.f32 %v1604, %v1780
      %v1851 = vadd.f32 %v1605, %v1783
      %v1852 = vadd.f32 %v1606, %v1785
      %v1853 = vadd.f32 %v1607, %v1788
      %v1854 = vadd.f32 %v1608, %v1790
      %v1855 = vld [vmem:[%s733 + $0x2] sm:$0x1]
      %v1856 = vlaneseq
      %v1857 = vshrl.u32 %v1856, 7
      %v1858 = vsub.s32 0, %v1857
      %v1859 = vrot.slane %v1855, %v1858
      %v1860 = vmul.f32 %v613, %v1859
      %v1861 = vmul.f32 %v614, %v1859
      %v1862 = vmul.f32 %v615, %v1859
      %v1863 = vmul.f32 %v616, %v1859
      %v1864 = vmul.f32 %v617, %v1859
      %v1865 = vmul.f32 %v618, %v1859
      %v1866 = vmul.f32 %v619, %v1859
      %v1867 = vmul.f32 %v620, %v1859
      %v1868 = vmul.f32 %v621, %v1859
      %v1869 = vmul.f32 %v622, %v1859
      %v1870 = vmul.f32 %v623, %v1859
      %v1871 = vmul.f32 %v624, %v1859
      %v1872 = vmul.f32 %v625, %v1859
      %v1873 = vmul.f32 %v626, %v1859
      %v1874 = vmul.f32 %v627, %v1859
      %v1875 = vmul.f32 %v628, %v1859
      %v1876 = vmul.f32 %v629, %v1859
      %v1877 = vmul.f32 %v630, %v1859
      %v1878 = vmul.f32 %v631, %v1859
      %v1879 = vmul.f32 %v632, %v1859
      %v1880 = vmul.f32 %v633, %v1859
      %v1881 = vmul.f32 %v634, %v1859
      %v1882 = vmul.f32 %v635, %v1859
      %v1883 = vmul.f32 %v636, %v1859
      %v1884 = vmul.f32 %v637, %v1859
      %v1885 = vmul.f32 %v638, %v1859
      %v1886 = vmul.f32 %v639, %v1859
      %v1887 = vmul.f32 %v640, %v1859
      %v1888 = vmul.f32 %v641, %v1859
      %v1889 = vmul.f32 %v642, %v1859
      %v1890 = vmul.f32 %v643, %v1859
      %v1891 = vmul.f32 %v644, %v1859
      %v1892 = vmul.f32 %v645, %v1859
      %v1893 = vmul.f32 %v646, %v1859
      %v1894 = vmul.f32 %v647, %v1859
      %v1895 = vmul.f32 %v648, %v1859
      %v1896 = vmul.f32 %v649, %v1859
      %v1897 = vmul.f32 %v650, %v1859
      %v1898 = vmul.f32 %v651, %v1859
      %v1899 = vmul.f32 %v652, %v1859
      %v1900 = vmul.f32 %v653, %v1859
      %v1901 = vmul.f32 %v654, %v1859
      %v1902 = vmul.f32 %v655, %v1859
      %v1903 = vmul.f32 %v656, %v1859
      %v1904 = vmul.f32 %v657, %v1859
      %v1905 = vmul.f32 %v658, %v1859
      %v1906 = vmul.f32 %v659, %v1859
      %v1907 = vmul.f32 %v660, %v1859
      %v1956 = vrot.slane %v1860, 2
      %v1957 = vrot.slane %v1861, 2
      %v1958 = vsel %vm1710, %v1956, %v1957
      %v1959 = vrot.slane %v1862, 2
      %v1960 = vsel %vm1710, %v1957, %v1959
      %v1961 = vrot.slane %v1863, 2
      %v1962 = vrot.slane %v1864, 2
      %v1963 = vsel %vm1710, %v1961, %v1962
      %v1964 = vrot.slane %v1865, 2
      %v1965 = vsel %vm1710, %v1962, %v1964
      %v1966 = vrot.slane %v1866, 2
      %v1967 = vrot.slane %v1867, 2
      %v1968 = vsel %vm1710, %v1966, %v1967
      %v1969 = vrot.slane %v1868, 2
      %v1970 = vsel %vm1710, %v1967, %v1969
      %v1971 = vrot.slane %v1869, 2
      %v1972 = vrot.slane %v1870, 2
      %v1973 = vsel %vm1710, %v1971, %v1972
      %v1974 = vrot.slane %v1871, 2
      %v1975 = vsel %vm1710, %v1972, %v1974
      %v1976 = vrot.slane %v1872, 2
      %v1977 = vrot.slane %v1873, 2
      %v1978 = vsel %vm1710, %v1976, %v1977
      %v1979 = vrot.slane %v1874, 2
      %v1980 = vsel %vm1710, %v1977, %v1979
      %v1981 = vrot.slane %v1875, 2
      %v1982 = vrot.slane %v1876, 2
      %v1983 = vsel %vm1710, %v1981, %v1982
      %v1984 = vrot.slane %v1877, 2
      %v1985 = vsel %vm1710, %v1982, %v1984
      %v1986 = vrot.slane %v1878, 2
      %v1987 = vrot.slane %v1879, 2
      %v1988 = vsel %vm1710, %v1986, %v1987
      %v1989 = vrot.slane %v1880, 2
      %v1990 = vsel %vm1710, %v1987, %v1989
      %v1991 = vrot.slane %v1881, 2
      %v1992 = vrot.slane %v1882, 2
      %v1993 = vsel %vm1710, %v1991, %v1992
      %v1994 = vrot.slane %v1883, 2
      %v1995 = vsel %vm1710, %v1992, %v1994
      %v1996 = vrot.slane %v1884, 2
      %v1997 = vrot.slane %v1885, 2
      %v1998 = vsel %vm1710, %v1996, %v1997
      %v1999 = vrot.slane %v1886, 2
      %v2000 = vsel %vm1710, %v1997, %v1999
      %v2001 = vrot.slane %v1887, 2
      %v2002 = vrot.slane %v1888, 2
      %v2003 = vsel %vm1710, %v2001, %v2002
      %v2004 = vrot.slane %v1889, 2
      %v2005 = vsel %vm1710, %v2002, %v2004
      %v2006 = vrot.slane %v1890, 2
      %v2007 = vrot.slane %v1891, 2
      %v2008 = vsel %vm1710, %v2006, %v2007
      %v2009 = vrot.slane %v1892, 2
      %v2010 = vsel %vm1710, %v2007, %v2009
      %v2011 = vrot.slane %v1893, 2
      %v2012 = vrot.slane %v1894, 2
      %v2013 = vsel %vm1710, %v2011, %v2012
      %v2014 = vrot.slane %v1895, 2
      %v2015 = vsel %vm1710, %v2012, %v2014
      %v2016 = vrot.slane %v1896, 2
      %v2017 = vrot.slane %v1897, 2
      %v2018 = vsel %vm1710, %v2016, %v2017
      %v2019 = vrot.slane %v1898, 2
      %v2020 = vsel %vm1710, %v2017, %v2019
      %v2021 = vrot.slane %v1899, 2
      %v2022 = vrot.slane %v1900, 2
      %v2023 = vsel %vm1710, %v2021, %v2022
      %v2024 = vrot.slane %v1901, 2
      %v2025 = vsel %vm1710, %v2022, %v2024
      %v2026 = vrot.slane %v1902, 2
      %v2027 = vrot.slane %v1903, 2
      %v2028 = vsel %vm1710, %v2026, %v2027
      %v2029 = vrot.slane %v1904, 2
      %v2030 = vsel %vm1710, %v2027, %v2029
      %v2031 = vrot.slane %v1905, 2
      %v2032 = vrot.slane %v1906, 2
      %v2033 = vsel %vm1710, %v2031, %v2032
      %v2034 = vrot.slane %v1907, 2
      %v2035 = vsel %vm1710, %v2032, %v2034
      %v2068 = vadd.f32 %v1823, %v1958
      %v2069 = vadd.f32 %v1824, %v1960
      %v2070 = vadd.f32 %v1825, %v1963
      %v2071 = vadd.f32 %v1826, %v1965
      %v2072 = vadd.f32 %v1827, %v1968
      %v2073 = vadd.f32 %v1828, %v1970
      %v2074 = vadd.f32 %v1829, %v1973
      %v2075 = vadd.f32 %v1830, %v1975
      %v2076 = vadd.f32 %v1831, %v1978
      %v2077 = vadd.f32 %v1832, %v1980
      %v2078 = vadd.f32 %v1833, %v1983
      %v2079 = vadd.f32 %v1834, %v1985
      %v2080 = vadd.f32 %v1835, %v1988
      %v2081 = vadd.f32 %v1836, %v1990
      %v2082 = vadd.f32 %v1837, %v1993
      %v2083 = vadd.f32 %v1838, %v1995
      %v2084 = vadd.f32 %v1839, %v1998
      %v2085 = vadd.f32 %v1840, %v2000
      %v2086 = vadd.f32 %v1841, %v2003
      %v2087 = vadd.f32 %v1842, %v2005
      %v2088 = vadd.f32 %v1843, %v2008
      %v2089 = vadd.f32 %v1844, %v2010
      %v2090 = vadd.f32 %v1845, %v2013
      %v2091 = vadd.f32 %v1846, %v2015
      %v2092 = vadd.f32 %v1847, %v2018
      %v2093 = vadd.f32 %v1848, %v2020
      %v2094 = vadd.f32 %v1849, %v2023
      %v2095 = vadd.f32 %v1850, %v2025
      %v2096 = vadd.f32 %v1851, %v2028
      %v2097 = vadd.f32 %v1852, %v2030
      %v2098 = vadd.f32 %v1853, %v2033
      %v2099 = vadd.f32 %v1854, %v2035
      %v2100 = vld [vmem:[%s803 + $0x2] sm:$0x1]
      %v2101 = vlaneseq
      %v2102 = vshrl.u32 %v2101, 7
      %v2103 = vsub.s32 0, %v2102
      %v2104 = vrot.slane %v2100, %v2103
      %v2105 = vmul.f32 %v616, %v2104
      %v2106 = vmul.f32 %v617, %v2104
      %v2107 = vmul.f32 %v618, %v2104
      %v2108 = vmul.f32 %v619, %v2104
      %v2109 = vmul.f32 %v620, %v2104
      %v2110 = vmul.f32 %v621, %v2104
      %v2111 = vmul.f32 %v622, %v2104
      %v2112 = vmul.f32 %v623, %v2104
      %v2113 = vmul.f32 %v624, %v2104
      %v2114 = vmul.f32 %v625, %v2104
      %v2115 = vmul.f32 %v626, %v2104
      %v2116 = vmul.f32 %v627, %v2104
      %v2117 = vmul.f32 %v628, %v2104
      %v2118 = vmul.f32 %v629, %v2104
      %v2119 = vmul.f32 %v630, %v2104
      %v2120 = vmul.f32 %v631, %v2104
      %v2121 = vmul.f32 %v632, %v2104
      %v2122 = vmul.f32 %v633, %v2104
      %v2123 = vmul.f32 %v634, %v2104
      %v2124 = vmul.f32 %v635, %v2104
      %v2125 = vmul.f32 %v636, %v2104
      %v2126 = vmul.f32 %v637, %v2104
      %v2127 = vmul.f32 %v638, %v2104
      %v2128 = vmul.f32 %v639, %v2104
      %v2129 = vmul.f32 %v640, %v2104
      %v2130 = vmul.f32 %v641, %v2104
      %v2131 = vmul.f32 %v642, %v2104
      %v2132 = vmul.f32 %v643, %v2104
      %v2133 = vmul.f32 %v644, %v2104
      %v2134 = vmul.f32 %v645, %v2104
      %v2135 = vmul.f32 %v646, %v2104
      %v2136 = vmul.f32 %v647, %v2104
      %v2137 = vmul.f32 %v648, %v2104
      %v2138 = vmul.f32 %v649, %v2104
      %v2139 = vmul.f32 %v650, %v2104
      %v2140 = vmul.f32 %v651, %v2104
      %v2141 = vmul.f32 %v652, %v2104
      %v2142 = vmul.f32 %v653, %v2104
      %v2143 = vmul.f32 %v654, %v2104
      %v2144 = vmul.f32 %v655, %v2104
      %v2145 = vmul.f32 %v656, %v2104
      %v2146 = vmul.f32 %v657, %v2104
      %v2147 = vmul.f32 %v658, %v2104
      %v2148 = vmul.f32 %v659, %v2104
      %v2149 = vmul.f32 %v660, %v2104
      %v2150 = vmul.f32 %v661, %v2104
      %v2151 = vmul.f32 %v662, %v2104
      %v2152 = vmul.f32 %v663, %v2104
      %v2201 = vrot.slane %v2105, 2
      %v2202 = vrot.slane %v2106, 2
      %v2203 = vsel %vm1710, %v2201, %v2202
      %v2204 = vrot.slane %v2107, 2
      %v2205 = vsel %vm1710, %v2202, %v2204
      %v2206 = vrot.slane %v2108, 2
      %v2207 = vrot.slane %v2109, 2
      %v2208 = vsel %vm1710, %v2206, %v2207
      %v2209 = vrot.slane %v2110, 2
      %v2210 = vsel %vm1710, %v2207, %v2209
      %v2211 = vrot.slane %v2111, 2
      %v2212 = vrot.slane %v2112, 2
      %v2213 = vsel %vm1710, %v2211, %v2212
      %v2214 = vrot.slane %v2113, 2
      %v2215 = vsel %vm1710, %v2212, %v2214
      %v2216 = vrot.slane %v2114, 2
      %v2217 = vrot.slane %v2115, 2
      %v2218 = vsel %vm1710, %v2216, %v2217
      %v2219 = vrot.slane %v2116, 2
      %v2220 = vsel %vm1710, %v2217, %v2219
      %v2221 = vrot.slane %v2117, 2
      %v2222 = vrot.slane %v2118, 2
      %v2223 = vsel %vm1710, %v2221, %v2222
      %v2224 = vrot.slane %v2119, 2
      %v2225 = vsel %vm1710, %v2222, %v2224
      %v2226 = vrot.slane %v2120, 2
      %v2227 = vrot.slane %v2121, 2
      %v2228 = vsel %vm1710, %v2226, %v2227
      %v2229 = vrot.slane %v2122, 2
      %v2230 = vsel %vm1710, %v2227, %v2229
      %v2231 = vrot.slane %v2123, 2
      %v2232 = vrot.slane %v2124, 2
      %v2233 = vsel %vm1710, %v2231, %v2232
      %v2234 = vrot.slane %v2125, 2
      %v2235 = vsel %vm1710, %v2232, %v2234
      %v2236 = vrot.slane %v2126, 2
      %v2237 = vrot.slane %v2127, 2
      %v2238 = vsel %vm1710, %v2236, %v2237
      %v2239 = vrot.slane %v2128, 2
      %v2240 = vsel %vm1710, %v2237, %v2239
      %v2241 = vrot.slane %v2129, 2
      %v2242 = vrot.slane %v2130, 2
      %v2243 = vsel %vm1710, %v2241, %v2242
      %v2244 = vrot.slane %v2131, 2
      %v2245 = vsel %vm1710, %v2242, %v2244
      %v2246 = vrot.slane %v2132, 2
      %v2247 = vrot.slane %v2133, 2
      %v2248 = vsel %vm1710, %v2246, %v2247
      %v2249 = vrot.slane %v2134, 2
      %v2250 = vsel %vm1710, %v2247, %v2249
      %v2251 = vrot.slane %v2135, 2
      %v2252 = vrot.slane %v2136, 2
      %v2253 = vsel %vm1710, %v2251, %v2252
      %v2254 = vrot.slane %v2137, 2
      %v2255 = vsel %vm1710, %v2252, %v2254
      %v2256 = vrot.slane %v2138, 2
      %v2257 = vrot.slane %v2139, 2
      %v2258 = vsel %vm1710, %v2256, %v2257
      %v2259 = vrot.slane %v2140, 2
      %v2260 = vsel %vm1710, %v2257, %v2259
      %v2261 = vrot.slane %v2141, 2
      %v2262 = vrot.slane %v2142, 2
      %v2263 = vsel %vm1710, %v2261, %v2262
      %v2264 = vrot.slane %v2143, 2
      %v2265 = vsel %vm1710, %v2262, %v2264
      %v2266 = vrot.slane %v2144, 2
      %v2267 = vrot.slane %v2145, 2
      %v2268 = vsel %vm1710, %v2266, %v2267
      %v2269 = vrot.slane %v2146, 2
      %v2270 = vsel %vm1710, %v2267, %v2269
      %v2271 = vrot.slane %v2147, 2
      %v2272 = vrot.slane %v2148, 2
      %v2273 = vsel %vm1710, %v2271, %v2272
      %v2274 = vrot.slane %v2149, 2
      %v2275 = vsel %vm1710, %v2272, %v2274
      %v2276 = vrot.slane %v2150, 2
      %v2277 = vrot.slane %v2151, 2
      %v2278 = vsel %vm1710, %v2276, %v2277
      %v2279 = vrot.slane %v2152, 2
      %v2280 = vsel %vm1710, %v2277, %v2279
      %v2313 = vadd.f32 %v2068, %v2203
      %v2314 = vadd.f32 %v2069, %v2205
      %v2315 = vadd.f32 %v2070, %v2208
      %v2316 = vadd.f32 %v2071, %v2210
      %v2317 = vadd.f32 %v2072, %v2213
      %v2318 = vadd.f32 %v2073, %v2215
      %v2319 = vadd.f32 %v2074, %v2218
      %v2320 = vadd.f32 %v2075, %v2220
      %v2321 = vadd.f32 %v2076, %v2223
      %v2322 = vadd.f32 %v2077, %v2225
      %v2323 = vadd.f32 %v2078, %v2228
      %v2324 = vadd.f32 %v2079, %v2230
      %v2325 = vadd.f32 %v2080, %v2233
      %v2326 = vadd.f32 %v2081, %v2235
      %v2327 = vadd.f32 %v2082, %v2238
      %v2328 = vadd.f32 %v2083, %v2240
      %v2329 = vadd.f32 %v2084, %v2243
      %v2330 = vadd.f32 %v2085, %v2245
      %v2331 = vadd.f32 %v2086, %v2248
      %v2332 = vadd.f32 %v2087, %v2250
      %v2333 = vadd.f32 %v2088, %v2253
      %v2334 = vadd.f32 %v2089, %v2255
      %v2335 = vadd.f32 %v2090, %v2258
      %v2336 = vadd.f32 %v2091, %v2260
      %v2337 = vadd.f32 %v2092, %v2263
      %v2338 = vadd.f32 %v2093, %v2265
      %v2339 = vadd.f32 %v2094, %v2268
      %v2340 = vadd.f32 %v2095, %v2270
      %v2341 = vadd.f32 %v2096, %v2273
      %v2342 = vadd.f32 %v2097, %v2275
      %v2343 = vadd.f32 %v2098, %v2278
      %v2344 = vadd.f32 %v2099, %v2280
      %v2345 = vld [vmem:[%s457] sm:$0x1]
      %v2347 = vlaneseq
      %v2348 = vshrl.u32 %v2347, 7
      %v2349 = vsub.s32 0, %v2348
      %v2350 = vrot.slane %v2345, %v2349
      %v2352 = vadd.f32 %v2313, %v2350
      %v2353 = vadd.f32 %v2314, %v2350
      %v2354 = vadd.f32 %v2315, %v2350
      %v2355 = vadd.f32 %v2316, %v2350
      %v2356 = vadd.f32 %v2317, %v2350
      %v2357 = vadd.f32 %v2318, %v2350
      %v2358 = vadd.f32 %v2319, %v2350
      %v2359 = vadd.f32 %v2320, %v2350
      %v2360 = vadd.f32 %v2321, %v2350
      %v2361 = vadd.f32 %v2322, %v2350
      %v2362 = vadd.f32 %v2323, %v2350
      %v2363 = vadd.f32 %v2324, %v2350
      %v2364 = vadd.f32 %v2325, %v2350
      %v2365 = vadd.f32 %v2326, %v2350
      %v2366 = vadd.f32 %v2327, %v2350
      %v2367 = vadd.f32 %v2328, %v2350
      %v2368 = vadd.f32 %v2329, %v2350
      %v2369 = vadd.f32 %v2330, %v2350
      %v2370 = vadd.f32 %v2331, %v2350
      %v2371 = vadd.f32 %v2332, %v2350
      %v2372 = vadd.f32 %v2333, %v2350
      %v2373 = vadd.f32 %v2334, %v2350
      %v2374 = vadd.f32 %v2335, %v2350
      %v2375 = vadd.f32 %v2336, %v2350
      %v2376 = vadd.f32 %v2337, %v2350
      %v2377 = vadd.f32 %v2338, %v2350
      %v2378 = vadd.f32 %v2339, %v2350
      %v2379 = vadd.f32 %v2340, %v2350
      %v2380 = vadd.f32 %v2341, %v2350
      %v2381 = vadd.f32 %v2342, %v2350
      %v2382 = vadd.f32 %v2343, %v2350
      %v2383 = vadd.f32 %v2344, %v2350
      %v2384 = vmax.f32 %v472, %v2352
      %v2385 = vmax.f32 %v473, %v2353
      %v2386 = vmax.f32 %v474, %v2354
      %v2387 = vmax.f32 %v475, %v2355
      %v2388 = vmax.f32 %v476, %v2356
      %v2389 = vmax.f32 %v477, %v2357
      %v2390 = vmax.f32 %v478, %v2358
      %v2391 = vmax.f32 %v479, %v2359
      %v2392 = vmax.f32 %v480, %v2360
      %v2393 = vmax.f32 %v481, %v2361
      %v2394 = vmax.f32 %v482, %v2362
      %v2395 = vmax.f32 %v483, %v2363
      %v2396 = vmax.f32 %v484, %v2364
      %v2397 = vmax.f32 %v485, %v2365
      %v2398 = vmax.f32 %v486, %v2366
      %v2399 = vmax.f32 %v487, %v2367
      %v2400 = vmax.f32 %v488, %v2368
      %v2401 = vmax.f32 %v489, %v2369
      %v2402 = vmax.f32 %v490, %v2370
      %v2403 = vmax.f32 %v491, %v2371
      %v2404 = vmax.f32 %v492, %v2372
      %v2405 = vmax.f32 %v493, %v2373
      %v2406 = vmax.f32 %v494, %v2374
      %v2407 = vmax.f32 %v495, %v2375
      %v2408 = vmax.f32 %v496, %v2376
      %v2409 = vmax.f32 %v497, %v2377
      %v2410 = vmax.f32 %v498, %v2378
      %v2411 = vmax.f32 %v499, %v2379
      %v2412 = vmax.f32 %v500, %v2380
      %v2413 = vmax.f32 %v501, %v2381
      %v2414 = vmax.f32 %v502, %v2382
      %v2415 = vmax.f32 %v503, %v2383
      %2416 = vst.msk [vmem:[%s470] sm:$0xff] %vm504, %v2384
      %2417 = vst.msk [vmem:[%s470 + $0x8] sm:$0xff] %vm504, %v2385
      %2418 = vst.msk [vmem:[%s470 + $0x10] sm:$0xff] %vm504, %v2386
      %2419 = vst.msk [vmem:[%s470 + $0x18] sm:$0xff] %vm504, %v2387
      %2420 = vst.msk [vmem:[%s470 + $0x20] sm:$0xff] %vm504, %v2388
      %2421 = vst.msk [vmem:[%s470 + $0x28] sm:$0xff] %vm504, %v2389
      %2422 = vst.msk [vmem:[%s470 + $0x30] sm:$0xff] %vm504, %v2390
      %2423 = vst.msk [vmem:[%s470 + $0x38] sm:$0xff] %vm504, %v2391
      %2424 = vst.msk [vmem:[%s470 + $0x40] sm:$0xff] %vm504, %v2392
      %2425 = vst.msk [vmem:[%s470 + $0x48] sm:$0xff] %vm504, %v2393
      %2426 = vst.msk [vmem:[%s470 + $0x50] sm:$0xff] %vm504, %v2394
      %2427 = vst.msk [vmem:[%s470 + $0x58] sm:$0xff] %vm504, %v2395
      %2428 = vst.msk [vmem:[%s470 + $0x60] sm:$0xff] %vm504, %v2396
      %2429 = vst.msk [vmem:[%s470 + $0x68] sm:$0xff] %vm504, %v2397
      %2430 = vst.msk [vmem:[%s470 + $0x70] sm:$0xff] %vm504, %v2398
      %2431 = vst.msk [vmem:[%s470 + $0x78] sm:$0xff] %vm504, %v2399
      %2432 = vst.msk [vmem:[%s470 + $0x80] sm:$0xff] %vm504, %v2400
      %2433 = vst.msk [vmem:[%s470 + $0x88] sm:$0xff] %vm504, %v2401
      %2434 = vst.msk [vmem:[%s470 + $0x90] sm:$0xff] %vm504, %v2402
      %2435 = vst.msk [vmem:[%s470 + $0x98] sm:$0xff] %vm504, %v2403
      %2436 = vst.msk [vmem:[%s470 + $0xa0] sm:$0xff] %vm504, %v2404
      %2437 = vst.msk [vmem:[%s470 + $0xa8] sm:$0xff] %vm504, %v2405
      %2438 = vst.msk [vmem:[%s470 + $0xb0] sm:$0xff] %vm504, %v2406
      %2439 = vst.msk [vmem:[%s470 + $0xb8] sm:$0xff] %vm504, %v2407
      %2440 = vst.msk [vmem:[%s470 + $0xc0] sm:$0xff] %vm504, %v2408
      %2441 = vst.msk [vmem:[%s470 + $0xc8] sm:$0xff] %vm504, %v2409
      %2442 = vst.msk [vmem:[%s470 + $0xd0] sm:$0xff] %vm504, %v2410
      %2443 = vst.msk [vmem:[%s470 + $0xd8] sm:$0xff] %vm504, %v2411
      %2444 = vst.msk [vmem:[%s470 + $0xe0] sm:$0xff] %vm504, %v2412
      %2445 = vst.msk [vmem:[%s470 + $0xe8] sm:$0xff] %vm504, %v2413
      %2446 = vst.msk [vmem:[%s470 + $0xf0] sm:$0xff] %vm504, %v2414
      %2447 = vst.msk [vmem:[%s470 + $0xf8] sm:$0xff] %vm504, %v2415
      %s2448 = smul.u32 16, %s22
      %p2449 = scmp.lt.s32.totalorder %s21, 1
      %s2450 = scalar_select %p2449, %s21, 1
      %p2451 = scmp.lt.s32.totalorder %s2448, 15
      %s2452 = scalar_select %p2451, %s2448, 15
      %p2453 = scmp.lt.s32.totalorder %s23, 0
      %s2454 = scalar_select %p2453, %s23, 0
      %s2455 = smul.addr %s2452, 2
      %s2456 = sadd.s32 %s2454, %s2455
      %s2457 = smul.addr %s2450, 32
      %s2458 = sadd.s32 %s2456, %s2457
      %s2459 = smul.addr %s2458, 8
      %s2460 = scalar_lea.vmem %s5, %s2459
      // Predicated region
      $region49: #{tpu_custom_call.1} parent=39 // pred_check
        %p2461 = pneg %p215
      $region50: #{tpu_custom_call.1} parent=39 // pred_check_branch
        %2463 = sbr.rel (%p2461) target = $region52
      $region51: #{tpu_custom_call.1} parent=39 // pred_region
        %s2464 = smul.u32 16, %s22
      $region52: #{tpu_custom_call.1} parent=39 // pred_fallthru
        _
    $region40: #{tpu_custom_call.1} parent=5 // pred_fallthru
      _
    %p2465 = scmp.le.s32.totalorder 2, %s11
    // Predicated region
    $region53: #{tpu_custom_call.1} parent=5 // pred_check
      %p2466 = pneg %p2465
    $region54: #{tpu_custom_call.1} parent=5 // pred_check_branch
      %2468 = sbr.rel (%p2466) target = $region56
    $region55: #{tpu_custom_call.1} parent=5 // pred_region
      %s2469 = ssub.s32 %s11, 2
      // Predicated region
      $region57: #{tpu_custom_call.1} parent=55 // pred_check
        %p2470 = pneg %p221
      $region58: #{tpu_custom_call.1} parent=55 // pred_check_branch
        %2472 = sbr.rel (%p2470) target = $region60
      $region59: #{tpu_custom_call.1} parent=55 // pred_region
        %s2473 = smul.u32 16, %s25
        %p2474 = scmp.lt.s32.totalorder %s24, 1
        %s2475 = scalar_select %p2474, %s24, 1
        %p2476 = scmp.lt.s32.totalorder %s2473, 15
        %s2477 = scalar_select %p2476, %s2473, 15
        %p2478 = scmp.lt.s32.totalorder %s26, 0
        %s2479 = scalar_select %p2478, %s26, 0
        %s2480 = smul.addr %s2477, 2
        %s2481 = sadd.s32 %s2479, %s2480
        %s2482 = smul.addr %s2475, 32
        %s2483 = sadd.s32 %s2481, %s2482
        %s2484 = smul.addr %s2483, 8
        %s2485 = scalar_lea.vmem %s5, %s2484
      $region60: #{tpu_custom_call.1} parent=55 // pred_fallthru
        _
    $region56: #{tpu_custom_call.1} parent=5 // pred_fallthru
      _
  $region6: #{tpu_custom_call.1} parent=0 // loop_footer
    %s15 = sadd.s32 1, %s11
  $region7: #{tpu_custom_call.1} parent=0 // loop_footer_branch
    %10 = sbr.rel target = $region3
  $region8: #{tpu_custom_call.1} parent=0 // loop_exit
    _

</llo_original>
